<compile_context>
chip_gen: v7x
topology: tpu7x:2x2x1
jax: 0.10.0
libtpu: 0.0.40
codegen_flags: <defaults>
</compile_context>

<pallas_src>
import functools

import numpy as np
import jax
import jax.numpy as jnp
from jax.experimental import pallas as pl
from jax.experimental.pallas import tpu as pltpu

BN_EPS = 1e-5
MXU_DTYPE = jnp.bfloat16   # MXU operands; accumulation + BN stay f32.


# ----------------------------------------------------------------------------
# Bilinear interpolation matrix (nn.Upsample(mode='bilinear', align_corners=False))
# ----------------------------------------------------------------------------
def _bilinear_matrix(in_size, out_size, scale_factor):
    i = np.arange(out_size, dtype=np.float64)
    src = (i + 0.5) / float(scale_factor) - 0.5
    src = np.maximum(src, 0.0)
    i0 = np.minimum(np.floor(src).astype(np.int64), in_size - 1)
    i1 = np.minimum(i0 + 1, in_size - 1)
    w1 = (src - i0).astype(np.float32)
    w0 = (1.0 - w1).astype(np.float32)
    m = np.zeros((out_size, in_size), dtype=np.float32)
    m[np.arange(out_size), i0] += w0
    m[np.arange(out_size), i1] += w1
    return m


# ----------------------------------------------------------------------------
# Kernel: per Cout block, KH pairs of 2D MXU matmuls + fused training-mode BN.
# ----------------------------------------------------------------------------
def _fused_kernel(x_ref, g_ref, h_ref, indt_ref, ind_ref, gam_ref, bet_ref,
                  o_ref, *, kh, count, eps):
    # x_ref   : [N*H,   Cin*W]     bf16   input, rows=(n,h), lanes=(c,w)
    # g_ref   : [KH, Cin*W, Cb*Wo] bf16   conv-weight x width-interp operators
    # h_ref   : [KH, N*Ho, N*H]    bf16   height-interp operators (dh-shifted)
    # indt_ref: [Cb*Wo, Cb]        f32    lane -> channel indicator (transposed)
    # ind_ref : [Cb, Cb*Wo]        f32    channel -> lane indicator
    # gam_ref : [1, Cb*Wo]         f32    gamma scattered to lanes
    # bet_ref : [1, Cb*Wo]         f32    beta scattered to lanes
    # o_ref   : [N*Ho, Cb*Wo]      f32    rows=(n,u), lanes=(o_local,v)

    # ---- upsample + pad + conv: 2*KH lane-dense MXU matmuls, f32 accumulation ----
    acc = jnp.zeros(o_ref.shape, jnp.float32)
    for dh in range(kh):
        t = jnp.dot(x_ref[...], g_ref[dh],
                    preferred_element_type=jnp.float32)          # [N*H, Cb*Wo]
        acc = acc + jnp.dot(h_ref[dh], t.astype(MXU_DTYPE),
                            preferred_element_type=jnp.float32)  # [N*Ho, Cb*Wo]

    # ---- BatchNorm (training mode, biased var), single-pass sum / sum-of-squares ----
    colsum = jnp.sum(acc, axis=0, keepdims=True)                 # [1, Cb*Wo]
    colsq = jnp.sum(acc * acc, axis=0, keepdims=True)            # [1, Cb*Wo]
    csum = jnp.dot(colsum, indt_ref[...], preferred_element_type=jnp.float32)  # [1, Cb]
    csq = jnp.dot(colsq, indt_ref[...], preferred_element_type=jnp.float32)    # [1, Cb]
    mean = csum / count
    var = csq / count - mean * mean
    inv = jax.lax.rsqrt(var + eps)
    # Broadcast per-channel stats back to lane rows (tiny matmuls, keeps stores
    # full-width instead of 32-lane masked writes per channel).
    mean_row = jnp.dot(mean, ind_ref[...], preferred_element_type=jnp.float32)  # [1, Cb*Wo]
    inv_row = jnp.dot(inv, ind_ref[...], preferred_element_type=jnp.float32)    # [1, Cb*Wo]
    scale_row = inv_row * gam_ref[...]
    o_ref[...] = (acc - mean_row) * scale_row + bet_ref[...]


# ----------------------------------------------------------------------------
# Wrapper: host-side operator construction (parameter/config-sized only) + call.
# ----------------------------------------------------------------------------
def bn_bilinear_deconv2d_forward(x, params, *, scale_factor, stride, padding):
    w_conv = params["conv_w"]
    gamma = params["bn_gamma"]
    beta = params["bn_beta"]

    n, cin, h, w = x.shape
    cout, _, kh, kw = w_conv.shape
    hup, wup = h * scale_factor, w * scale_factor
    hp, wp = hup + 2 * padding, wup + 2 * padding
    ho = (hp - kh) // stride + 1
    wo = (wp - kw) // stride + 1

    # --- interpolation matrices with the conv's zero padding folded in as zero rows
    whp = np.zeros((hp, h), np.float32)
    whp[padding:padding + hup] = _bilinear_matrix(h, hup, scale_factor)
    wwp = np.zeros((wp, w), np.float32)
    wwp[padding:padding + wup] = _bilinear_matrix(w, wup, scale_factor)

    # dh/dw shifted (and stride-decimated) interp slices
    wh_taps = np.stack([whp[dh:dh + stride * (ho - 1) + 1:stride] for dh in range(kh)], 0)  # [KH,Ho,H]
    ww_taps = np.stack([wwp[dw:dw + stride * (wo - 1) + 1:stride] for dw in range(kw)], 0)  # [KW,Wo,W]

    # --- G[dh][(c,w), (o,v)] = sum_dw  conv_w[o,c,dh,dw] * WWpad[v*stride+dw, w]
    w_np = np.asarray(w_conv, np.float32)
    g_ops = np.einsum('ocyx,xvw->ycwov', w_np, ww_taps).reshape(kh, cin * w, cout * wo)

    # --- H[dh][(n,u), (n,h)] = WHpad[u*stride+dh, h]   (block-diagonal over n)
    h_ops = np.zeros((kh, n * ho, n * h), np.float32)
    for b in range(n):
        h_ops[:, b * ho:(b + 1) * ho, b * h:(b + 1) * h] = wh_taps

    # --- Cout blocking: split channels across grid steps (v7x: 2nd TensorCore).
    nblk = 2 if (cout % 2 == 0 and ((cout // 2) * wo) % 128 == 0) else 1
    cpb = cout // nblk                     # channels per grid block
    lanes = cpb * wo                       # lanes per grid block (128 here)

    # lane <-> channel indicators (per block; identical for every block)
    ind = np.kron(np.eye(cpb, dtype=np.float32), np.ones((1, wo), np.float32))  # [Cb, Cb*Wo]
    indt = np.ascontiguousarray(ind.T)                                          # [Cb*Wo, Cb]

    # --- tiny XLA-side glue (input / parameter sized only)
    x0 = jnp.transpose(x, (0, 2, 1, 3)).reshape(n * h, cin * w).astype(MXU_DTYPE)
    g_j = jnp.asarray(g_ops, MXU_DTYPE)
    h_j = jnp.asarray(h_ops, MXU_DTYPE)
    ind_j = jnp.asarray(ind)
    indt_j = jnp.asarray(indt)
    gamma_row = jnp.repeat(gamma.astype(jnp.float32), wo).reshape(1, cout * wo)
    beta_row = jnp.repeat(beta.astype(jnp.float32), wo).reshape(1, cout * wo)

    kernel = functools.partial(_fused_kernel, kh=kh, count=float(n * ho * wo), eps=BN_EPS)

    flops = kh * (2 * (n * h) * (cin * w) * (cout * wo)
                  + 2 * (n * ho) * (n * h) * (cout * wo))
    bytes_accessed = (x0.size * 2 + g_ops.size * 2 + h_ops.size * 2
                      + (ind.size + indt.size) * 4 + 2 * cout * wo * 4
                      + n * ho * cout * wo * 4)

    out2d = pl.pallas_call(
        kernel,
        out_shape=jax.ShapeDtypeStruct((n * ho, cout * wo), jnp.float32),
        grid=(nblk,),
        in_specs=[
            pl.BlockSpec((n * h, cin * w), lambda i: (0, 0)),        # x0
            pl.BlockSpec((kh, cin * w, lanes), lambda i: (0, 0, i)),  # G ops (Cout block)
            pl.BlockSpec((kh, n * ho, n * h), lambda i: (0, 0, 0)),   # H ops
            pl.BlockSpec((lanes, cpb), lambda i: (0, 0)),             # ind^T
            pl.BlockSpec((cpb, lanes), lambda i: (0, 0)),             # ind
            pl.BlockSpec((1, lanes), lambda i: (0, i)),               # gamma row
            pl.BlockSpec((1, lanes), lambda i: (0, i)),               # beta row
        ],
        out_specs=pl.BlockSpec((n * ho, lanes), lambda i: (0, i)),
        compiler_params=pltpu.CompilerParams(
            dimension_semantics=("parallel",)),
        cost_estimate=pl.CostEstimate(
            flops=flops, transcendentals=cout, bytes_accessed=bytes_accessed),
    )(x0, g_j, h_j, indt_j, ind_j, gamma_row, beta_row)

    # [(n,u), (o,v)] -> NCHW (tiny output-sized XLA reshape/transpose).
    return jnp.transpose(out2d.reshape(n, ho, cout, wo), (0, 2, 1, 3))


# ----------------------------------------------------------------------------
# Plain-JAX reference (same math, standard ops, f32) for a numerical self-check.
# ----------------------------------------------------------------------------
def _reference(x, conv_w, gamma, beta, *, scale_factor, stride, padding):
    n, c, h, w = x.shape
    wh = jnp.asarray(_bilinear_matrix(h, h * scale_factor, scale_factor))
    ww = jnp.asarray(_bilinear_matrix(w, w * scale_factor, scale_factor))
    up = jnp.einsum('uh,nchw,vw->ncuv', wh, x, ww)
    y = jax.lax.conv_general_dilated(
        up, conv_w, (stride, stride), [(padding, padding), (padding, padding)],
        dimension_numbers=('NCHW', 'OIHW', 'NCHW'))
    mu = jnp.mean(y, axis=(0, 2, 3), keepdims=True)
    var = jnp.mean(jnp.square(y - mu), axis=(0, 2, 3), keepdims=True)
    return ((y - mu) * jax.lax.rsqrt(var + BN_EPS) * gamma.reshape(1, -1, 1, 1)
            + beta.reshape(1, -1, 1, 1))


if __name__ == "__main__":
    # module config: bn_bilinear_deconv2d(scale_factor=2, n_channels=4, out_channels=8,
    #                                     kernel_size=3, stride=1, padding=1)
    scale_factor, n_channels, out_channels = 2, 4, 8
    kernel_size, stride, padding = 3, 1, 1

    key = jax.random.PRNGKey(0)
    k_x, k_w = jax.random.split(key)
    x = jax.random.normal(k_x, (2, n_channels, 16, 16), dtype=jnp.float32)

    # Deterministic parameter init (PyTorch-style kaiming-uniform bound for conv,
    # BN gamma=1 / beta=0 defaults).
    fan_in = n_channels * kernel_size * kernel_size
    bound = 1.0 / np.sqrt(fan_in)
    params = {
        "conv_w": jax.random.uniform(
            k_w, (out_channels, n_channels, kernel_size, kernel_size),
            dtype=jnp.float32, minval=-bound, maxval=bound),
        "bn_gamma": jnp.ones((out_channels,), jnp.float32),
        "bn_beta": jnp.zeros((out_channels,), jnp.float32),
    }

    out = bn_bilinear_deconv2d_forward(
        x, params, scale_factor=scale_factor, stride=stride, padding=padding)
    out = jax.block_until_ready(out)

    assert out.shape == (2, out_channels, 32, 32), out.shape
    ref = _reference(x, params["conv_w"], params["bn_gamma"], params["bn_beta"],
                     scale_factor=scale_factor, stride=stride, padding=padding)
    # bf16 MXU operands (f32 accumulation / BN): tolerance loosened from 1e-4.
    np.testing.assert_allclose(np.asarray(out), np.asarray(ref), rtol=5e-2, atol=5e-2)

    print("KERNEL_OK")
</pallas_src>

<mosaic_0001>
module attributes {stable_mosaic.version = 11 : i64} {
  func.func @_fused_kernel(%arg0: i32, %arg1: memref<32x64xbf16, #tpu.memory_space<vmem>>, %arg2: memref<3x64x128xbf16, #tpu.memory_space<vmem>>, %arg3: memref<3x64x32xbf16, #tpu.memory_space<vmem>>, %arg4: memref<128x4xf32, #tpu.memory_space<vmem>>, %arg5: memref<4x128xf32, #tpu.memory_space<vmem>>, %arg6: memref<1x128xf32, #tpu.memory_space<vmem>>, %arg7: memref<1x128xf32, #tpu.memory_space<vmem>>, %arg8: memref<64x128xf32, #tpu.memory_space<vmem>>) attributes {dimension_semantics = [#tpu.dimension_semantics<parallel>], iteration_bounds = array<i64: 2>, scalar_prefetch = 0 : i64, scratch_operands = 0 : i64, tpu.core_type = #tpu.core_type<tc>, window_params = [{pipeline_mode = #tpu.pipeline_mode<synchronous>, transform_indices = @transform_0, window_bounds = array<i64: 32, 64>}, {transform_indices = @transform_1, window_bounds = array<i64: 3, 64, 128>}, {pipeline_mode = #tpu.pipeline_mode<synchronous>, transform_indices = @transform_2, window_bounds = array<i64: 3, 64, 32>}, {pipeline_mode = #tpu.pipeline_mode<synchronous>, transform_indices = @transform_3, window_bounds = array<i64: 128, 4>}, {pipeline_mode = #tpu.pipeline_mode<synchronous>, transform_indices = @transform_4, window_bounds = array<i64: 4, 128>}, {transform_indices = @transform_5, window_bounds = array<i64: 1, 128>}, {transform_indices = @transform_6, window_bounds = array<i64: 1, 128>}, {transform_indices = @transform_7, window_bounds = array<i64: 64, 128>}]} {
    %cst = arith.constant 0.000000e+00 : f32
    %0 = vector.broadcast %cst : f32 to vector<64x128xf32>
    %c0 = arith.constant 0 : index
    %c0_0 = arith.constant 0 : index
    %1 = vector.load %arg1[%c0, %c0_0] : memref<32x64xbf16, #tpu.memory_space<vmem>>, vector<32x64xbf16>
    %c0_1 = arith.constant 0 : index
    %c0_2 = arith.constant 0 : index
    %c0_3 = arith.constant 0 : index
    %2 = vector.load %arg2[%c0_1, %c0_2, %c0_3] : memref<3x64x128xbf16, #tpu.memory_space<vmem>>, vector<1x64x128xbf16>
    %3 = vector.shape_cast %2 : vector<1x64x128xbf16> to vector<64x128xbf16>
    %cst_4 = arith.constant dense<0.000000e+00> : vector<32x128xf32>
    %4 = tpu.matmul %1, %3, %cst_4 {dimension_numbers = #tpu.dot_dimension_numbers<[1], [0], [0], [1], [0, 0, 1, 1], [], []>} : vector<32x64xbf16>, vector<64x128xbf16>, vector<32x128xf32> -> vector<32x128xf32>
    %c0_5 = arith.constant 0 : index
    %c0_6 = arith.constant 0 : index
    %c0_7 = arith.constant 0 : index
    %5 = vector.load %arg3[%c0_5, %c0_6, %c0_7] : memref<3x64x32xbf16, #tpu.memory_space<vmem>>, vector<1x64x32xbf16>
    %6 = vector.shape_cast %5 : vector<1x64x32xbf16> to vector<64x32xbf16>
    %7 = arith.truncf %4 : vector<32x128xf32> to vector<32x128xbf16>
    %cst_8 = arith.constant dense<0.000000e+00> : vector<64x128xf32>
    %8 = tpu.matmul %6, %7, %cst_8 {dimension_numbers = #tpu.dot_dimension_numbers<[1], [0], [0], [1], [0, 0, 1, 1], [], []>} : vector<64x32xbf16>, vector<32x128xbf16>, vector<64x128xf32> -> vector<64x128xf32>
    %9 = arith.addf %0, %8 : vector<64x128xf32>
    %c0_9 = arith.constant 0 : index
    %c0_10 = arith.constant 0 : index
    %10 = vector.load %arg1[%c0_9, %c0_10] : memref<32x64xbf16, #tpu.memory_space<vmem>>, vector<32x64xbf16>
    %c1 = arith.constant 1 : index
    %c0_11 = arith.constant 0 : index
    %c0_12 = arith.constant 0 : index
    %11 = vector.load %arg2[%c1, %c0_11, %c0_12] : memref<3x64x128xbf16, #tpu.memory_space<vmem>>, vector<1x64x128xbf16>
    %12 = vector.shape_cast %11 : vector<1x64x128xbf16> to vector<64x128xbf16>
    %cst_13 = arith.constant dense<0.000000e+00> : vector<32x128xf32>
    %13 = tpu.matmul %10, %12, %cst_13 {dimension_numbers = #tpu.dot_dimension_numbers<[1], [0], [0], [1], [0, 0, 1, 1], [], []>} : vector<32x64xbf16>, vector<64x128xbf16>, vector<32x128xf32> -> vector<32x128xf32>
    %c1_14 = arith.constant 1 : index
    %c0_15 = arith.constant 0 : index
    %c0_16 = arith.constant 0 : index
    %14 = vector.load %arg3[%c1_14, %c0_15, %c0_16] : memref<3x64x32xbf16, #tpu.memory_space<vmem>>, vector<1x64x32xbf16>
    %15 = vector.shape_cast %14 : vector<1x64x32xbf16> to vector<64x32xbf16>
    %16 = arith.truncf %13 : vector<32x128xf32> to vector<32x128xbf16>
    %cst_17 = arith.constant dense<0.000000e+00> : vector<64x128xf32>
    %17 = tpu.matmul %15, %16, %cst_17 {dimension_numbers = #tpu.dot_dimension_numbers<[1], [0], [0], [1], [0, 0, 1, 1], [], []>} : vector<64x32xbf16>, vector<32x128xbf16>, vector<64x128xf32> -> vector<64x128xf32>
    %18 = arith.addf %9, %17 : vector<64x128xf32>
    %c0_18 = arith.constant 0 : index
    %c0_19 = arith.constant 0 : index
    %19 = vector.load %arg1[%c0_18, %c0_19] : memref<32x64xbf16, #tpu.memory_space<vmem>>, vector<32x64xbf16>
    %c2 = arith.constant 2 : index
    %c0_20 = arith.constant 0 : index
    %c0_21 = arith.constant 0 : index
    %20 = vector.load %arg2[%c2, %c0_20, %c0_21] : memref<3x64x128xbf16, #tpu.memory_space<vmem>>, vector<1x64x128xbf16>
    %21 = vector.shape_cast %20 : vector<1x64x128xbf16> to vector<64x128xbf16>
    %cst_22 = arith.constant dense<0.000000e+00> : vector<32x128xf32>
    %22 = tpu.matmul %19, %21, %cst_22 {dimension_numbers = #tpu.dot_dimension_numbers<[1], [0], [0], [1], [0, 0, 1, 1], [], []>} : vector<32x64xbf16>, vector<64x128xbf16>, vector<32x128xf32> -> vector<32x128xf32>
    %c2_23 = arith.constant 2 : index
    %c0_24 = arith.constant 0 : index
    %c0_25 = arith.constant 0 : index
    %23 = vector.load %arg3[%c2_23, %c0_24, %c0_25] : memref<3x64x32xbf16, #tpu.memory_space<vmem>>, vector<1x64x32xbf16>
    %24 = vector.shape_cast %23 : vector<1x64x32xbf16> to vector<64x32xbf16>
    %25 = arith.truncf %22 : vector<32x128xf32> to vector<32x128xbf16>
    %cst_26 = arith.constant dense<0.000000e+00> : vector<64x128xf32>
    %26 = tpu.matmul %24, %25, %cst_26 {dimension_numbers = #tpu.dot_dimension_numbers<[1], [0], [0], [1], [0, 0, 1, 1], [], []>} : vector<64x32xbf16>, vector<32x128xbf16>, vector<64x128xf32> -> vector<64x128xf32>
    %27 = arith.addf %18, %26 : vector<64x128xf32>
    %cst_27 = arith.constant dense<0.000000e+00> : vector<128xf32>
    %28 = vector.multi_reduction <add>, %27, %cst_27 [0] : vector<64x128xf32> to vector<128xf32>
    %29 = vector.shape_cast %28 : vector<128xf32> to vector<1x128xf32>
    %30 = arith.mulf %27, %27 : vector<64x128xf32>
    %cst_28 = arith.constant dense<0.000000e+00> : vector<128xf32>
    %31 = vector.multi_reduction <add>, %30, %cst_28 [0] : vector<64x128xf32> to vector<128xf32>
    %32 = vector.shape_cast %31 : vector<128xf32> to vector<1x128xf32>
    %c0_29 = arith.constant 0 : index
    %c0_30 = arith.constant 0 : index
    %33 = vector.load %arg4[%c0_29, %c0_30] : memref<128x4xf32, #tpu.memory_space<vmem>>, vector<128x4xf32>
    %cst_31 = arith.constant dense<0.000000e+00> : vector<1x4xf32>
    %34 = tpu.matmul %29, %33, %cst_31 {dimension_numbers = #tpu.dot_dimension_numbers<[1], [0], [0], [1], [0, 0, 1, 1], [], []>} : vector<1x128xf32>, vector<128x4xf32>, vector<1x4xf32> -> vector<1x4xf32>
    %c0_32 = arith.constant 0 : index
    %c0_33 = arith.constant 0 : index
    %35 = vector.load %arg4[%c0_32, %c0_33] : memref<128x4xf32, #tpu.memory_space<vmem>>, vector<128x4xf32>
    %cst_34 = arith.constant dense<0.000000e+00> : vector<1x4xf32>
    %36 = tpu.matmul %32, %35, %cst_34 {dimension_numbers = #tpu.dot_dimension_numbers<[1], [0], [0], [1], [0, 0, 1, 1], [], []>} : vector<1x128xf32>, vector<128x4xf32>, vector<1x4xf32> -> vector<1x4xf32>
    %cst_35 = arith.constant 2.048000e+03 : f32
    %37 = vector.broadcast %cst_35 : f32 to vector<1x4xf32>
    %38 = arith.divf %34, %37 : vector<1x4xf32>
    %cst_36 = arith.constant 2.048000e+03 : f32
    %39 = vector.broadcast %cst_36 : f32 to vector<1x4xf32>
    %40 = arith.divf %36, %39 : vector<1x4xf32>
    %41 = arith.mulf %38, %38 : vector<1x4xf32>
    %42 = arith.subf %40, %41 : vector<1x4xf32>
    %cst_37 = arith.constant 9.99999974E-6 : f32
    %43 = vector.broadcast %cst_37 : f32 to vector<1x4xf32>
    %44 = arith.addf %42, %43 : vector<1x4xf32>
    %45 = math.rsqrt %44 : vector<1x4xf32>
    %c0_38 = arith.constant 0 : index
    %c0_39 = arith.constant 0 : index
    %46 = vector.load %arg5[%c0_38, %c0_39] : memref<4x128xf32, #tpu.memory_space<vmem>>, vector<4x128xf32>
    %cst_40 = arith.constant dense<0.000000e+00> : vector<1x128xf32>
    %47 = tpu.matmul %38, %46, %cst_40 {dimension_numbers = #tpu.dot_dimension_numbers<[1], [0], [0], [1], [0, 0, 1, 1], [], []>} : vector<1x4xf32>, vector<4x128xf32>, vector<1x128xf32> -> vector<1x128xf32>
    %c0_41 = arith.constant 0 : index
    %c0_42 = arith.constant 0 : index
    %48 = vector.load %arg5[%c0_41, %c0_42] : memref<4x128xf32, #tpu.memory_space<vmem>>, vector<4x128xf32>
    %cst_43 = arith.constant dense<0.000000e+00> : vector<1x128xf32>
    %49 = tpu.matmul %45, %48, %cst_43 {dimension_numbers = #tpu.dot_dimension_numbers<[1], [0], [0], [1], [0, 0, 1, 1], [], []>} : vector<1x4xf32>, vector<4x128xf32>, vector<1x128xf32> -> vector<1x128xf32>
    %c0_44 = arith.constant 0 : index
    %c0_45 = arith.constant 0 : index
    %50 = vector.load %arg6[%c0_44, %c0_45] : memref<1x128xf32, #tpu.memory_space<vmem>>, vector<1x128xf32>
    %51 = arith.mulf %49, %50 : vector<1x128xf32>
    %52 = vector.broadcast %47 : vector<1x128xf32> to vector<64x128xf32>
    %53 = arith.subf %27, %52 : vector<64x128xf32>
    %54 = vector.broadcast %51 : vector<1x128xf32> to vector<64x128xf32>
    %55 = arith.mulf %53, %54 : vector<64x128xf32>
    %c0_46 = arith.constant 0 : index
    %c0_47 = arith.constant 0 : index
    %56 = vector.load %arg7[%c0_46, %c0_47] : memref<1x128xf32, #tpu.memory_space<vmem>>, vector<1x128xf32>
    %57 = vector.broadcast %56 : vector<1x128xf32> to vector<64x128xf32>
    %58 = arith.addf %55, %57 : vector<64x128xf32>
    %c0_48 = arith.constant 0 : index
    %c0_49 = arith.constant 0 : index
    %59 = vector.load %arg8[%c0_48, %c0_49] : memref<64x128xf32, #tpu.memory_space<vmem>>, vector<64x128xf32>
    tpu.vector_store %arg8[%c0_48, %c0_49], %58 {strides = array<i32>} : memref<64x128xf32, #tpu.memory_space<vmem>>, vector<64x128xf32>,
    return
  }
  func.func @transform_0(%arg0: i32) -> (i32, i32) {
    %c0_i32 = arith.constant 0 : i32
    %c0_i32_0 = arith.constant 0 : i32
    %c0_i32_1 = arith.constant 0 : i32
    return %c0_i32, %c0_i32_0 : i32, i32
  }
  func.func @transform_1(%arg0: i32) -> (i32, i32, i32) {
    %c0_i32 = arith.constant 0 : i32
    %c0_i32_0 = arith.constant 0 : i32
    %c0_i32_1 = arith.constant 0 : i32
    return %c0_i32, %c0_i32_0, %arg0 : i32, i32, i32
  }
  func.func @transform_2(%arg0: i32) -> (i32, i32, i32) {
    %c0_i32 = arith.constant 0 : i32
    %c0_i32_0 = arith.constant 0 : i32
    %c0_i32_1 = arith.constant 0 : i32
    %c0_i32_2 = arith.constant 0 : i32
    return %c0_i32, %c0_i32_0, %c0_i32_1 : i32, i32, i32
  }
  func.func @transform_3(%arg0: i32) -> (i32, i32) {
    %c0_i32 = arith.constant 0 : i32
    %c0_i32_0 = arith.constant 0 : i32
    %c0_i32_1 = arith.constant 0 : i32
    return %c0_i32, %c0_i32_0 : i32, i32
  }
  func.func @transform_4(%arg0: i32) -> (i32, i32) {
    %c0_i32 = arith.constant 0 : i32
    %c0_i32_0 = arith.constant 0 : i32
    %c0_i32_1 = arith.constant 0 : i32
    return %c0_i32, %c0_i32_0 : i32, i32
  }
  func.func @transform_5(%arg0: i32) -> (i32, i32) {
    %c0_i32 = arith.constant 0 : i32
    %c0_i32_0 = arith.constant 0 : i32
    return %c0_i32, %arg0 : i32, i32
  }
  func.func @transform_6(%arg0: i32) -> (i32, i32) {
    %c0_i32 = arith.constant 0 : i32
    %c0_i32_0 = arith.constant 0 : i32
    return %c0_i32, %arg0 : i32, i32
  }
  func.func @transform_7(%arg0: i32) -> (i32, i32) {
    %c0_i32 = arith.constant 0 : i32
    %c0_i32_0 = arith.constant 0 : i32
    return %c0_i32, %arg0 : i32, i32
  }
}

</mosaic_0001>

<llo_original>
// kernel: tpu_custom_call.1
$region0: #{tpu_custom_call.1}
  #allocation0 [shape = 'u32[]', space=smem, size = 0x4, offset = 0x4, fixed_abs, tag = 'smem constant byte address 0x4 - core index']
  #allocation1 [shape = 'u32[144,128]{1,0:T(1,128)}', space=vmem, size = 0x12000, scoped, tag = 'internal scratch']
  %s0 = inlined_call_operand.vmem [shape: bf16[32,64], index: 0, kind: input, shape index: {}]
  %s1 = inlined_call_operand.vmem [shape: bf16[3,64,256], index: 1, kind: input, shape index: {}]
  %s2 = inlined_call_operand.vmem [shape: bf16[3,64,32], index: 2, kind: input, shape index: {}]
  %s3 = inlined_call_operand.vmem [shape: f32[128,4], index: 3, kind: input, shape index: {}]
  %s4 = inlined_call_operand.vmem [shape: f32[4,128], index: 4, kind: input, shape index: {}]
  %s5 = inlined_call_operand.vmem [shape: f32[1,256], index: 5, kind: input, shape index: {}]
  %s6 = inlined_call_operand.vmem [shape: f32[1,256], index: 6, kind: input, shape index: {}]
  %s7 = inlined_call_operand.hbm [shape: f32[64,256], index: 7, kind: output, shape index: {}]
  %s8 = sld [smem:[#allocation0]]
  $region102: #{tpu_custom_call.1} parent=0
    _
  %s10 = ssub.s32 1, %s8
  %s11 = scalar_select 0, %s10, %s8
  $region1: #{tpu_custom_call.1} parent=0
    #allocation2 [shape = 'u8[98304]{0}', space=vmem, size = 0x18000, scoped, tag = 'input window, operand 1']
    #allocation3 [shape = 'u8[65536]{0}', space=vmem, size = 0x10000, scoped, tag = 'output window, operand 0']
    #allocation4 [shape = 's32[2]{0}', space=sflag, size = 0x8, scoped, tag = 'scoped memory for tpu_custom_call.1']
    %12 = vsyncpa [#allocation4], 0
    %s13 = scalar_lea.sflag [#allocation4], 1
    %14 = vsyncpa %s13, 0
    loop: start=0, step=1, limit=4
    $region2: #{tpu_custom_call.1} parent=1 // loop_pre_header
      _
    $region3: #{tpu_custom_call.1} parent=1 // loop_header
      %s16 = sphi 0, %s20
      %p17 = scmp.ge.s32.totalorder %s16, 4
      %s24 = sphi 0, %s24
      %s26 = sphi 0, %s24
      %s27 = sphi 0, %s26
      %s41 = sphi 0, %s27
      %s47 = sphi 0, %s49
      %s50 = sphi 0, %s47
      %s51 = sphi 0, %s50
      %s67 = sphi 0, %s51
      %s71 = sphi 0, %s71
      %s73 = sphi 0, %s71
      %s74 = sphi 0, %s73
      %s88 = sphi 0, %s74
      %s92 = sphi 0, %s92
      %s94 = sphi 0, %s92
      %s95 = sphi 0, %s94
      %s109 = sphi 0, %s95
      %s113 = sphi 0, %s113
      %s115 = sphi 0, %s113
      %s116 = sphi 0, %s115
      %s130 = sphi 0, %s116
      %s136 = sphi 0, %s138
      %s139 = sphi 0, %s136
      %s140 = sphi 0, %s139
      %s156 = sphi 0, %s140
      %s162 = sphi 0, %s164
      %s165 = sphi 0, %s162
      %s166 = sphi 0, %s165
      %s182 = sphi 0, %s166
      %s188 = sphi 0, %s190
      %s191 = sphi 0, %s188
      %s192 = sphi 0, %s191
      %s208 = sphi 0, %s192
    $region4: #{tpu_custom_call.1} parent=1 // loop_header_branch
      %19 = sbr.rel (%p17) target = $region8
    $region5: #{tpu_custom_call.1} parent=1 // loop_body
      %s21 = ssub.s32 %s16, 1
      %s22 = ssub.s32 %s16, 2
      %s23 = sadd.s32 %s16, 1
      %s25 = sadd.s32 %s24, 1
      %p28 = scmp.eq.s32.totalorder %s16, 1
      %p29 = scmp.ne.s32.totalorder %s24, %s26
      %p30 = scmp.eq.s32.totalorder %s16, 0
      %p31 = por %p29, %p30
      %p32 = scmp.ne.s32.totalorder %s24, %s26
      %p33 = scmp.eq.s32.totalorder %s21, 1
      %p34 = por %p32, %p33
      %p35 = scmp.ne.s32.totalorder %s26, %s27
      %p36 = scmp.eq.s32.totalorder %s21, 0
      %p37 = por %p35, %p36
      %p38 = scmp.ne.s32.totalorder %s26, %s27
      %p39 = scmp.eq.s32.totalorder %s22, 1
      %p40 = por %p38, %p39
      %p42 = scmp.ne.s32.totalorder %s27, %s41
      %p43 = scmp.eq.s32.totalorder %s22, 0
      %p44 = por %p42, %p43
      %s45 = ssub.s32 %s16, %s23
      %p46 = scmp.eq.s32.totalorder %s45, 0
      %s48 = sadd.s32 %s47, 1
      %s49 = scalar_select %p46, %s47, %s48
      %p52 = pneg %p46
      %p53 = scmp.eq.s32.totalorder %s16, 1
      %p54 = por %p52, %p53
      %p55 = scmp.ne.s32.totalorder %s47, %s50
      %p56 = scmp.eq.s32.totalorder %s16, 0
      %p57 = por %p55, %p56
      %p58 = scmp.ne.s32.totalorder %s47, %s50
      %p59 = scmp.eq.s32.totalorder %s21, 1
      %p60 = por %p58, %p59
      %p61 = scmp.ne.s32.totalorder %s50, %s51
      %p62 = scmp.eq.s32.totalorder %s21, 0
      %p63 = por %p61, %p62
      %p64 = scmp.ne.s32.totalorder %s50, %s51
      %p65 = scmp.eq.s32.totalorder %s22, 1
      %p66 = por %p64, %p65
      %p68 = scmp.ne.s32.totalorder %s51, %s67
      %p69 = scmp.eq.s32.totalorder %s22, 0
      %p70 = por %p68, %p69
      %s72 = sadd.s32 %s71, 1
      %p75 = scmp.eq.s32.totalorder %s16, 1
      %p76 = scmp.ne.s32.totalorder %s71, %s73
      %p77 = scmp.eq.s32.totalorder %s16, 0
      %p78 = por %p76, %p77
      %p79 = scmp.ne.s32.totalorder %s71, %s73
      %p80 = scmp.eq.s32.totalorder %s21, 1
      %p81 = por %p79, %p80
      %p82 = scmp.ne.s32.totalorder %s73, %s74
      %p83 = scmp.eq.s32.totalorder %s21, 0
      %p84 = por %p82, %p83
      %p85 = scmp.ne.s32.totalorder %s73, %s74
      %p86 = scmp.eq.s32.totalorder %s22, 1
      %p87 = por %p85, %p86
      %p89 = scmp.ne.s32.totalorder %s74, %s88
      %p90 = scmp.eq.s32.totalorder %s22, 0
      %p91 = por %p89, %p90
      %s93 = sadd.s32 %s92, 1
      %p96 = scmp.eq.s32.totalorder %s16, 1
      %p97 = scmp.ne.s32.totalorder %s92, %s94
      %p98 = scmp.eq.s32.totalorder %s16, 0
      %p99 = por %p97, %p98
      %p100 = scmp.ne.s32.totalorder %s92, %s94
      %p101 = scmp.eq.s32.totalorder %s21, 1
      %p102 = por %p100, %p101
      %p103 = scmp.ne.s32.totalorder %s94, %s95
      %p104 = scmp.eq.s32.totalorder %s21, 0
      %p105 = por %p103, %p104
      %p106 = scmp.ne.s32.totalorder %s94, %s95
      %p107 = scmp.eq.s32.totalorder %s22, 1
      %p108 = por %p106, %p107
      %p110 = scmp.ne.s32.totalorder %s95, %s109
      %p111 = scmp.eq.s32.totalorder %s22, 0
      %p112 = por %p110, %p111
      %s114 = sadd.s32 %s113, 1
      %p117 = scmp.eq.s32.totalorder %s16, 1
      %p118 = scmp.ne.s32.totalorder %s113, %s115
      %p119 = scmp.eq.s32.totalorder %s16, 0
      %p120 = por %p118, %p119
      %p121 = scmp.ne.s32.totalorder %s113, %s115
      %p122 = scmp.eq.s32.totalorder %s21, 1
      %p123 = por %p121, %p122
      %p124 = scmp.ne.s32.totalorder %s115, %s116
      %p125 = scmp.eq.s32.totalorder %s21, 0
      %p126 = por %p124, %p125
      %p127 = scmp.ne.s32.totalorder %s115, %s116
      %p128 = scmp.eq.s32.totalorder %s22, 1
      %p129 = por %p127, %p128
      %p131 = scmp.ne.s32.totalorder %s116, %s130
      %p132 = scmp.eq.s32.totalorder %s22, 0
      %p133 = por %p131, %p132
      %s134 = ssub.s32 %s16, %s23
      %p135 = scmp.eq.s32.totalorder %s134, 0
      %s137 = sadd.s32 %s136, 1
      %s138 = scalar_select %p135, %s136, %s137
      %p141 = pneg %p135
      %p142 = scmp.eq.s32.totalorder %s16, 1
      %p143 = por %p141, %p142
      %p144 = scmp.ne.s32.totalorder %s136, %s139
      %p145 = scmp.eq.s32.totalorder %s16, 0
      %p146 = por %p144, %p145
      %p147 = scmp.ne.s32.totalorder %s136, %s139
      %p148 = scmp.eq.s32.totalorder %s21, 1
      %p149 = por %p147, %p148
      %p150 = scmp.ne.s32.totalorder %s139, %s140
      %p151 = scmp.eq.s32.totalorder %s21, 0
      %p152 = por %p150, %p151
      %p153 = scmp.ne.s32.totalorder %s139, %s140
      %p154 = scmp.eq.s32.totalorder %s22, 1
      %p155 = por %p153, %p154
      %p157 = scmp.ne.s32.totalorder %s140, %s156
      %p158 = scmp.eq.s32.totalorder %s22, 0
      %p159 = por %p157, %p158
      %s160 = ssub.s32 %s16, %s23
      %p161 = scmp.eq.s32.totalorder %s160, 0
      %s163 = sadd.s32 %s162, 1
      %s164 = scalar_select %p161, %s162, %s163
      %p167 = pneg %p161
      %p168 = scmp.eq.s32.totalorder %s16, 1
      %p169 = por %p167, %p168
      %p170 = scmp.ne.s32.totalorder %s162, %s165
      %p171 = scmp.eq.s32.totalorder %s16, 0
      %p172 = por %p170, %p171
      %p173 = scmp.ne.s32.totalorder %s162, %s165
      %p174 = scmp.eq.s32.totalorder %s21, 1
      %p175 = por %p173, %p174
      %p176 = scmp.ne.s32.totalorder %s165, %s166
      %p177 = scmp.eq.s32.totalorder %s21, 0
      %p178 = por %p176, %p177
      %p179 = scmp.ne.s32.totalorder %s165, %s166
      %p180 = scmp.eq.s32.totalorder %s22, 1
      %p181 = por %p179, %p180
      %p183 = scmp.ne.s32.totalorder %s166, %s182
      %p184 = scmp.eq.s32.totalorder %s22, 0
      %p185 = por %p183, %p184
      %s186 = ssub.s32 %s16, %s23
      %p187 = scmp.eq.s32.totalorder %s186, 0
      %s189 = sadd.s32 %s188, 1
      %s190 = scalar_select %p187, %s188, %s189
      %p193 = pneg %p187
      %p194 = scmp.eq.s32.totalorder %s16, 1
      %p195 = por %p193, %p194
      %p196 = scmp.ne.s32.totalorder %s188, %s191
      %p197 = scmp.eq.s32.totalorder %s16, 0
      %p198 = por %p196, %p197
      %p199 = scmp.ne.s32.totalorder %s188, %s191
      %p200 = scmp.eq.s32.totalorder %s21, 1
      %p201 = por %p199, %p200
      %p202 = scmp.ne.s32.totalorder %s191, %s192
      %p203 = scmp.eq.s32.totalorder %s21, 0
      %p204 = por %p202, %p203
      %p205 = scmp.ne.s32.totalorder %s191, %s192
      %p206 = scmp.eq.s32.totalorder %s22, 1
      %p207 = por %p205, %p206
      %p209 = scmp.ne.s32.totalorder %s192, %s208
      %p210 = scmp.eq.s32.totalorder %s22, 0
      %p211 = por %p209, %p210
      %p212 = scmp.le.s32.totalorder 1, %s16
      %p213 = scmp.lt.s32.totalorder %s16, 3
      %p214 = pnand %p212, %p213
      %p215 = pneg %p214
      // Predicated region
      $region9: #{tpu_custom_call.1} parent=5 // pred_check
        _
      $region10: #{tpu_custom_call.1} parent=5 // pred_check_branch
        %217 = sbr.rel (%p214) target = $region12
      $region11: #{tpu_custom_call.1} parent=5 // pred_region
        %s218 = ssub.s32 %s16, 1
        // Predicated region
        $region13: #{tpu_custom_call.1} parent=11 // pred_check
          %p219 = pneg %p37
        $region14: #{tpu_custom_call.1} parent=11 // pred_check_branch
          %221 = sbr.rel (%p219) target = $region16
        $region15: #{tpu_custom_call.1} parent=11 // pred_region
          _
        $region16: #{tpu_custom_call.1} parent=11 // pred_fallthru
          _
        // Predicated region
        $region17: #{tpu_custom_call.1} parent=11 // pred_check
          %p222 = pneg %p84
        $region18: #{tpu_custom_call.1} parent=11 // pred_check_branch
          %224 = sbr.rel (%p222) target = $region20
        $region19: #{tpu_custom_call.1} parent=11 // pred_region
          _
        $region20: #{tpu_custom_call.1} parent=11 // pred_fallthru
          _
        // Predicated region
        $region21: #{tpu_custom_call.1} parent=11 // pred_check
          %p225 = pneg %p105
        $region22: #{tpu_custom_call.1} parent=11 // pred_check_branch
          %227 = sbr.rel (%p225) target = $region24
        $region23: #{tpu_custom_call.1} parent=11 // pred_region
          _
        $region24: #{tpu_custom_call.1} parent=11 // pred_fallthru
          _
        // Predicated region
        $region25: #{tpu_custom_call.1} parent=11 // pred_check
          %p228 = pneg %p126
        $region26: #{tpu_custom_call.1} parent=11 // pred_check_branch
          %230 = sbr.rel (%p228) target = $region28
        $region27: #{tpu_custom_call.1} parent=11 // pred_region
          _
        $region28: #{tpu_custom_call.1} parent=11 // pred_fallthru
          _
      $region12: #{tpu_custom_call.1} parent=5 // pred_fallthru
        _
      %p231 = scmp.lt.s32.totalorder %s16, 2
      // Predicated region
      $region29: #{tpu_custom_call.1} parent=5 // pred_check
        %p232 = pneg %p231
      $region30: #{tpu_custom_call.1} parent=5 // pred_check_branch
        %234 = sbr.rel (%p232) target = $region32
      $region31: #{tpu_custom_call.1} parent=5 // pred_region
        // Predicated region
        $region33: #{tpu_custom_call.1} parent=31 // pred_check
          %p235 = pneg %p57
        $region34: #{tpu_custom_call.1} parent=31 // pred_check_branch
          %237 = sbr.rel (%p235) target = $region36
        $region35: #{tpu_custom_call.1} parent=31 // pred_region
          %s238 = sand.u32 %s47, 1
          %s239 = sand.u32 %s47, 1
          %s240 = smul.addr %s239, 96
          %s241 = scalar_lea.vmem [#allocation2], %s240
          %s242 = smul.addr %s16, 4
          %s243 = scalar_lea.vmem %s1, %s242
          // Predicated region
          $region37: #{tpu_custom_call.1} parent=35 // pred_check
            _
          $region38: #{tpu_custom_call.1} parent=35 // pred_check_branch
            %245 = sbr.rel (0) target = $region40
          $region39: #{tpu_custom_call.1} parent=35 // pred_region
            // Predicated region
            $region41: #{tpu_custom_call.1} parent=39 // pred_check
              _
            $region42: #{tpu_custom_call.1} parent=39 // pred_check_branch
              %247 = sbr.rel target = $region44
            $region43: #{tpu_custom_call.1} parent=39 // pred_region
              // Predicated region
              $region56: #{tpu_custom_call.1} parent=43 // pred_check
                _
              $region57: #{tpu_custom_call.1} parent=43 // pred_check_branch
                %308 = sbr.rel (0) target = $region59
              $region58: #{tpu_custom_call.1} parent=43 // pred_region
                loop: start=0, step=1, limit=1
                $region60: #{tpu_custom_call.1} parent=58 // loop_pre_header
                  _
                $region61: #{tpu_custom_call.1} parent=58 // loop_header
                  %s310 = sphi 0, %s314
                  %p311 = scmp.ge.s32.totalorder %s310, 1
                  %s315 = sphi %s243, %s243
                  %s316 = sphi %s241, %s241
                $region62: #{tpu_custom_call.1} parent=58 // loop_header_branch
                  %313 = sbr.rel (%p311) target = $region66
                $region63: #{tpu_custom_call.1} parent=58 // loop_body
                  _
                $region64: #{tpu_custom_call.1} parent=58 // loop_footer
                  %s314 = sadd.s32 1, %s310
                $region65: #{tpu_custom_call.1} parent=58 // loop_footer_branch
                  %309 = sbr.rel target = $region61
                $region66: #{tpu_custom_call.1} parent=58 // loop_exit
                  _
                loop: start=0, step=1, limit=1
                $region67: #{tpu_custom_call.1} parent=58 // loop_pre_header
                  _
                $region68: #{tpu_custom_call.1} parent=58 // loop_header
                  %s319 = sphi 0, %s323
                  %p320 = scmp.ge.s32.totalorder %s319, 1
                  %s324 = sphi %s243, %s243
                  %s325 = sphi %s241, %s241
                $region69: #{tpu_custom_call.1} parent=58 // loop_header_branch
                  %322 = sbr.rel (%p320) target = $region73
                $region70: #{tpu_custom_call.1} parent=58 // loop_body
                  %v326 = vld [vmem:[%s324] sm:$0xf]
                  %327 = vst [vmem:[%s325] sm:$0xf] %v326
                  %v328 = vld [vmem:[%s324 + $0x8] sm:$0xf]
                  %329 = vst [vmem:[%s325 + $0x4] sm:$0xf] %v328
                  %v330 = vld [vmem:[%s324 + $0x10] sm:$0xf]
                  %331 = vst [vmem:[%s325 + $0x8] sm:$0xf] %v330
                  %v332 = vld [vmem:[%s324 + $0x18] sm:$0xf]
                  %333 = vst [vmem:[%s325 + $0xc] sm:$0xf] %v332
                  %v334 = vld [vmem:[%s324 + $0x20] sm:$0xf]
                  %335 = vst [vmem:[%s325 + $0x10] sm:$0xf] %v334
                  %v336 = vld [vmem:[%s324 + $0x28] sm:$0xf]
                  %337 = vst [vmem:[%s325 + $0x14] sm:$0xf] %v336
                  %v338 = vld [vmem:[%s324 + $0x30] sm:$0xf]
                  %339 = vst [vmem:[%s325 + $0x18] sm:$0xf] %v338
                  %v340 = vld [vmem:[%s324 + $0x38] sm:$0xf]
                  %341 = vst [vmem:[%s325 + $0x1c] sm:$0xf] %v340
                  %v342 = vld [vmem:[%s324 + $0x40] sm:$0xf]
                  %343 = vst [vmem:[%s325 + $0x20] sm:$0xf] %v342
                  %v344 = vld [vmem:[%s324 + $0x48] sm:$0xf]
                  %345 = vst [vmem:[%s325 + $0x24] sm:$0xf] %v344
                  %v346 = vld [vmem:[%s324 + $0x50] sm:$0xf]
                  %347 = vst [vmem:[%s325 + $0x28] sm:$0xf] %v346
                  %v348 = vld [vmem:[%s324 + $0x58] sm:$0xf]
                  %349 = vst [vmem:[%s325 + $0x2c] sm:$0xf] %v348
                  %v350 = vld [vmem:[%s324 + $0x60] sm:$0xf]
                  %351 = vst [vmem:[%s325 + $0x30] sm:$0xf] %v350
                  %v352 = vld [vmem:[%s324 + $0x68] sm:$0xf]
                  %353 = vst [vmem:[%s325 + $0x34] sm:$0xf] %v352
                  %v354 = vld [vmem:[%s324 + $0x70] sm:$0xf]
                  %355 = vst [vmem:[%s325 + $0x38] sm:$0xf] %v354
                  %v356 = vld [vmem:[%s324 + $0x78] sm:$0xf]
                  %357 = vst [vmem:[%s325 + $0x3c] sm:$0xf] %v356
                  %v358 = vld [vmem:[%s324 + $0x80] sm:$0xf]
                  %359 = vst [vmem:[%s325 + $0x40] sm:$0xf] %v358
                  %v360 = vld [vmem:[%s324 + $0x88] sm:$0xf]
                  %361 = vst [vmem:[%s325 + $0x44] sm:$0xf] %v360
                  %v362 = vld [vmem:[%s324 + $0x90] sm:$0xf]
                  %363 = vst [vmem:[%s325 + $0x48] sm:$0xf] %v362
                  %v364 = vld [vmem:[%s324 + $0x98] sm:$0xf]
                  %365 = vst [vmem:[%s325 + $0x4c] sm:$0xf] %v364
                  %v366 = vld [vmem:[%s324 + $0xa0] sm:$0xf]
                  %367 = vst [vmem:[%s325 + $0x50] sm:$0xf] %v366
                  %v368 = vld [vmem:[%s324 + $0xa8] sm:$0xf]
                  %369 = vst [vmem:[%s325 + $0x54] sm:$0xf] %v368
                  %v370 = vld [vmem:[%s324 + $0xb0] sm:$0xf]
                  %371 = vst [vmem:[%s325 + $0x58] sm:$0xf] %v370
                  %v372 = vld [vmem:[%s324 + $0xb8] sm:$0xf]
                  %373 = vst [vmem:[%s325 + $0x5c] sm:$0xf] %v372
                $region71: #{tpu_custom_call.1} parent=58 // loop_footer
                  %s323 = sadd.s32 1, %s319
                $region72: #{tpu_custom_call.1} parent=58 // loop_footer_branch
                  %318 = sbr.rel target = $region68
                $region73: #{tpu_custom_call.1} parent=58 // loop_exit
                  _
              $region59: #{tpu_custom_call.1} parent=43 // pred_fallthru
                _
            $region44: #{tpu_custom_call.1} parent=39 // pred_fallthru
              _
            // Predicated region
            $region45: #{tpu_custom_call.1} parent=39 // pred_check
              _
            $region46: #{tpu_custom_call.1} parent=39 // pred_check_branch
              %249 = sbr.rel (0) target = $region48
            $region47: #{tpu_custom_call.1} parent=39 // pred_region
              loop: start=0, step=1, limit=1
              $region49: #{tpu_custom_call.1} parent=47 // loop_pre_header
                _
              $region50: #{tpu_custom_call.1} parent=47 // loop_header
                %s252 = sphi 0, %s256
                %p253 = scmp.ge.s32.totalorder %s252, 1
                %s257 = sphi %s243, %s243
                %s258 = sphi %s241, %s241
              $region51: #{tpu_custom_call.1} parent=47 // loop_header_branch
                %255 = sbr.rel (%p253) target = $region55
              $region52: #{tpu_custom_call.1} parent=47 // loop_body
                %v259 = vld [vmem:[%s257] sm:$0xf]
                %260 = vst [vmem:[%s258] sm:$0xf] %v259
                %v261 = vld [vmem:[%s257 + $0x8] sm:$0xf]
                %262 = vst [vmem:[%s258 + $0x4] sm:$0xf] %v261
                %v263 = vld [vmem:[%s257 + $0x10] sm:$0xf]
                %264 = vst [vmem:[%s258 + $0x8] sm:$0xf] %v263
                %v265 = vld [vmem:[%s257 + $0x18] sm:$0xf]
                %266 = vst [vmem:[%s258 + $0xc] sm:$0xf] %v265
                %v267 = vld [vmem:[%s257 + $0x20] sm:$0xf]
                %268 = vst [vmem:[%s258 + $0x10] sm:$0xf] %v267
                %v269 = vld [vmem:[%s257 + $0x28] sm:$0xf]
                %270 = vst [vmem:[%s258 + $0x14] sm:$0xf] %v269
                %v271 = vld [vmem:[%s257 + $0x30] sm:$0xf]
                %272 = vst [vmem:[%s258 + $0x18] sm:$0xf] %v271
                %v273 = vld [vmem:[%s257 + $0x38] sm:$0xf]
                %274 = vst [vmem:[%s258 + $0x1c] sm:$0xf] %v273
                %v275 = vld [vmem:[%s257 + $0x40] sm:$0xf]
                %276 = vst [vmem:[%s258 + $0x20] sm:$0xf] %v275
                %v277 = vld [vmem:[%s257 + $0x48] sm:$0xf]
                %278 = vst [vmem:[%s258 + $0x24] sm:$0xf] %v277
                %v279 = vld [vmem:[%s257 + $0x50] sm:$0xf]
                %280 = vst [vmem:[%s258 + $0x28] sm:$0xf] %v279
                %v281 = vld [vmem:[%s257 + $0x58] sm:$0xf]
                %282 = vst [vmem:[%s258 + $0x2c] sm:$0xf] %v281
                %v283 = vld [vmem:[%s257 + $0x60] sm:$0xf]
                %284 = vst [vmem:[%s258 + $0x30] sm:$0xf] %v283
                %v285 = vld [vmem:[%s257 + $0x68] sm:$0xf]
                %286 = vst [vmem:[%s258 + $0x34] sm:$0xf] %v285
                %v287 = vld [vmem:[%s257 + $0x70] sm:$0xf]
                %288 = vst [vmem:[%s258 + $0x38] sm:$0xf] %v287
                %v289 = vld [vmem:[%s257 + $0x78] sm:$0xf]
                %290 = vst [vmem:[%s258 + $0x3c] sm:$0xf] %v289
                %v291 = vld [vmem:[%s257 + $0x80] sm:$0xf]
                %292 = vst [vmem:[%s258 + $0x40] sm:$0xf] %v291
                %v293 = vld [vmem:[%s257 + $0x88] sm:$0xf]
                %294 = vst [vmem:[%s258 + $0x44] sm:$0xf] %v293
                %v295 = vld [vmem:[%s257 + $0x90] sm:$0xf]
                %296 = vst [vmem:[%s258 + $0x48] sm:$0xf] %v295
                %v297 = vld [vmem:[%s257 + $0x98] sm:$0xf]
                %298 = vst [vmem:[%s258 + $0x4c] sm:$0xf] %v297
                %v299 = vld [vmem:[%s257 + $0xa0] sm:$0xf]
                %300 = vst [vmem:[%s258 + $0x50] sm:$0xf] %v299
                %v301 = vld [vmem:[%s257 + $0xa8] sm:$0xf]
                %302 = vst [vmem:[%s258 + $0x54] sm:$0xf] %v301
                %v303 = vld [vmem:[%s257 + $0xb0] sm:$0xf]
                %304 = vst [vmem:[%s258 + $0x58] sm:$0xf] %v303
                %v305 = vld [vmem:[%s257 + $0xb8] sm:$0xf]
                %306 = vst [vmem:[%s258 + $0x5c] sm:$0xf] %v305
              $region53: #{tpu_custom_call.1} parent=47 // loop_footer
                %s256 = sadd.s32 1, %s252
              $region54: #{tpu_custom_call.1} parent=47 // loop_footer_branch
                %251 = sbr.rel target = $region50
              $region55: #{tpu_custom_call.1} parent=47 // loop_exit
                _
            $region48: #{tpu_custom_call.1} parent=39 // pred_fallthru
              _
          $region40: #{tpu_custom_call.1} parent=35 // pred_fallthru
            _
          %374 = vnop
        $region36: #{tpu_custom_call.1} parent=31 // pred_fallthru
          _
        // Predicated region
        $region74: #{tpu_custom_call.1} parent=31 // pred_check
          %p375 = pneg %p146
        $region75: #{tpu_custom_call.1} parent=31 // pred_check_branch
          %377 = sbr.rel (%p375) target = $region77
        $region76: #{tpu_custom_call.1} parent=31 // pred_region
          %p378 = scmp.lt.s32.totalorder %s16, 1
          %s379 = scalar_select %p378, %s16, 1
          %s380 = scalar_lea.vmem %s5, %s379
        $region77: #{tpu_custom_call.1} parent=31 // pred_fallthru
          _
        // Predicated region
        $region78: #{tpu_custom_call.1} parent=31 // pred_check
          %p381 = pneg %p172
        $region79: #{tpu_custom_call.1} parent=31 // pred_check_branch
          %383 = sbr.rel (%p381) target = $region81
        $region80: #{tpu_custom_call.1} parent=31 // pred_region
          %p384 = scmp.lt.s32.totalorder %s16, 1
          %s385 = scalar_select %p384, %s16, 1
          %s386 = scalar_lea.vmem %s6, %s385
        $region81: #{tpu_custom_call.1} parent=31 // pred_fallthru
          _
      $region32: #{tpu_custom_call.1} parent=5 // pred_fallthru
        _
      %p387 = scmp.le.s32.totalorder 1, %s16
      %p388 = scmp.lt.s32.totalorder %s16, 3
      %p389 = pnand %p387, %p388
      %p390 = pneg %p389
      // Predicated region
      $region82: #{tpu_custom_call.1} parent=5 // pred_check
        _
      $region83: #{tpu_custom_call.1} parent=5 // pred_check_branch
        %392 = sbr.rel (%p389) target = $region85
      $region84: #{tpu_custom_call.1} parent=5 // pred_region
        %s393 = ssub.s32 %s16, 1
        %s394 = sand.u32 %s50, 1
        %s395 = sand.u32 %s50, 1
        %s396 = smul.addr %s395, 96
        %s397 = scalar_lea.vmem [#allocation2], %s396
        // Predicated region
        $region86: #{tpu_custom_call.1} parent=84 // pred_check
          %p398 = pneg %p63
        $region87: #{tpu_custom_call.1} parent=84 // pred_check_branch
          %400 = sbr.rel (%p398) target = $region89
        $region88: #{tpu_custom_call.1} parent=84 // pred_region
          _
        $region89: #{tpu_custom_call.1} parent=84 // pred_fallthru
          _
        %p401 = pneg %p37
        %p402 = pneg %p34
        %s403 = sand.u32 %s50, 1
        %s404 = sand.u32 %s50, 1
        %s405 = smul.addr %s404, 96
        %s406 = scalar_lea.vmem [#allocation2], %s405
        %p407 = pneg %p63
        %p408 = pneg %p60
        %p409 = pneg %p84
        %p410 = pneg %p81
        %p411 = pneg %p105
        %p412 = pneg %p102
        %p413 = pneg %p126
        %p414 = pneg %p123
        %p415 = scmp.lt.s32.totalorder %s21, 1
        %s416 = scalar_select %p415, %s21, 1
        %s417 = scalar_lea.vmem %s5, %s416
        %p418 = pneg %p152
        %p419 = pneg %p149
        %p420 = scmp.lt.s32.totalorder %s21, 1
        %s421 = scalar_select %p420, %s21, 1
        %s422 = scalar_lea.vmem %s6, %s421
        %p423 = pneg %p178
        %p424 = pneg %p175
        %p425 = pneg %p204
        %p426 = pneg %p201
        %s427 = sand.u32 %s191, 1
        %s428 = scalar_lea.sflag [#allocation4], %s427
        %s429 = sand.u32 %s191, 1
        %s430 = smul.addr %s429, 64
        %s431 = scalar_lea.vmem [#allocation3], %s430
        %p432 = scmp.lt.s32.totalorder %s21, 1
        %s433 = scalar_select %p432, %s21, 1
        %s434 = scalar_lea.vmem %s5, %s433
        %p435 = scmp.lt.s32.totalorder %s21, 1
        %s436 = scalar_select %p435, %s21, 1
        %s437 = scalar_lea.vmem %s6, %s436
        %v439 = vld [vmem:[%s0] sm:$0xf]
        %v440 = vld [vmem:[%s0 + $0x4] sm:$0xf]
        %v441 = vld [vmem:[%s0 + $0x8] sm:$0xf]
        %v442 = vld [vmem:[%s0 + $0xc] sm:$0xf]
        %v443 = vld [vmem:[%s397] sm:$0xf]
        %v444 = vld [vmem:[%s397 + $0x4] sm:$0xf]
        %v445 = vld [vmem:[%s397 + $0x8] sm:$0xf]
        %v446 = vld [vmem:[%s397 + $0xc] sm:$0xf]
        %v447 = vld [vmem:[%s397 + $0x10] sm:$0xf]
        %v448 = vld [vmem:[%s397 + $0x14] sm:$0xf]
        %v449 = vld [vmem:[%s397 + $0x18] sm:$0xf]
        %v450 = vld [vmem:[%s397 + $0x1c] sm:$0xf]
        %v455 = vunpack.c.l.b16 %v439
        %v456 = vunpack.c.l.b16 %v440
        %v457 = vunpack.c.l.b16 %v441
        %v458 = vunpack.c.l.b16 %v442
        %v459 = vpack.c.b16 %v456, %v455
        %v460 = vpack.c.b16 %v458, %v457
        %v469 = vunpack.c.l.b16 %v443
        %v470 = vunpack.c.l.b16 %v444
        %v471 = vunpack.c.l.b16 %v445
        %v472 = vunpack.c.l.b16 %v446
        %v473 = vunpack.c.l.b16 %v447
        %v474 = vunpack.c.l.b16 %v448
        %v475 = vunpack.c.l.b16 %v449
        %v476 = vunpack.c.l.b16 %v450
        %v477 = vpack.c.b16 %v470, %v469
        %v478 = vpack.c.b16 %v472, %v471
        %v479 = vpack.c.b16 %v474, %v473
        %v480 = vpack.c.b16 %v476, %v475
        %vm485 = vcmask 523264
        %v487 = vsel %vm485, %v459, 0
        %v490 = vsel %vm485, %v460, 0
        %492 = vmatprep.subr.bf16.mxu0 0
        %493 = vmatpush1.bf16.msra.mxu0 %v477
        %494 = vmatprep.subr.bf16.mxu0 0
        %495 = vmatpush1.bf16.msra.mxu0 %v478
        %496 = vmatprep.subr.bf16.mxu0 0
        %497 = vmatpush1.bf16.msra.mxu0 %v479
        %498 = vmatprep.subr.bf16.mxu0 0
        %499 = vmatpush1.bf16.msra.mxu0 %v480
        %500 = vmatprep.subr.bf16.mxu0 0
        %501 = vmatpush1.bf16.msra.mxu0 0
        %502 = vmatprep.subr.bf16.mxu0 0
        %503 = vmatpush1.bf16.msra.mxu0 0
        %504 = vmatprep.subr.bf16.mxu0 0
        %505 = vmatpush1.bf16.msra.mxu0 0
        %506 = vmatprep.subr.bf16.mxu0 0
        %507 = vmatpush1.bf16.msra.mxu0 0
        %508 = vmatprep.subr.bf16.mxu0 0
        %509 = vmatpush1.bf16.msra.mxu0 0
        %510 = vmatprep.subr.bf16.mxu0 0
        %511 = vmatpush1.bf16.msra.mxu0 0
        %512 = vmatprep.subr.bf16.mxu0 0
        %513 = vmatpush1.bf16.msra.mxu0 0
        %514 = vmatprep.subr.bf16.mxu0 0
        %515 = vmatpush1.bf16.msra.mxu0 0
        %516 = vmatprep.subr.bf16.mxu0 0
        %517 = vmatpush1.bf16.msra.mxu0 0
        %518 = vmatprep.subr.bf16.mxu0 0
        %519 = vmatpush1.bf16.msra.mxu0 0
        %520 = vmatprep.subr.bf16.mxu0 0
        %521 = vmatpush1.bf16.msra.mxu0 0
        %522 = vmatprep.subr.bf16.mxu0 0
        %523 = vmatpush1.bf16.msra.mxu0 0
        %524 = vmatprep.mubr.bf16.mxu0 0
        %525 = vmatmul.mubr.bf16.gmra.mrb[0].mxu0 %v487
        %v526 = vpop.f32.mrb[0].mxu0
        %v527 = vadd.f32 0.0, %v526
        %v528 = vpop.f32.mrb[0].mxu0
        %v529 = vpop.f32.mrb[0].mxu0
        %v530 = vadd.f32 0.0, %v529
        %v531 = vpop.f32.mrb[0].mxu0
        %532 = vmatprep.mubr.bf16.mxu0 0
        %533 = vmatmul.mubr.bf16.gmra.mrb[0].mxu0 %v490
        %v534 = vpop.f32.mrb[0].mxu0
        %v535 = vadd.f32 0.0, %v534
        %v536 = vpop.f32.mrb[0].mxu0
        %v537 = vpop.f32.mrb[0].mxu0
        %v538 = vadd.f32 0.0, %v537
        %v539 = vpop.f32.mrb[0].mxu0
        %540 = vdwg.mxu0
        %v541 = vld [vmem:[%s2] sm:$0xf]
        %v542 = vld [vmem:[%s2 + $0x4] sm:$0xf]
        %v543 = vld [vmem:[%s2 + $0x8] sm:$0xf]
        %v544 = vld [vmem:[%s2 + $0xc] sm:$0xf]
        %v545 = vld [vmem:[%s2 + $0x10] sm:$0xf]
        %v546 = vld [vmem:[%s2 + $0x14] sm:$0xf]
        %v547 = vld [vmem:[%s2 + $0x18] sm:$0xf]
        %v548 = vld [vmem:[%s2 + $0x1c] sm:$0xf]
        %v549 = vpack.c.bf16 %v530, %v527
        %v550 = vpack.c.bf16 %v538, %v535
        %s551 = scalar_lea.vmem %s397, 32 [#allocation2]
        %v552 = vld [vmem:[%s551] sm:$0xf]
        %v553 = vld [vmem:[%s551 + $0x4] sm:$0xf]
        %v554 = vld [vmem:[%s551 + $0x8] sm:$0xf]
        %v555 = vld [vmem:[%s551 + $0xc] sm:$0xf]
        %v556 = vld [vmem:[%s551 + $0x10] sm:$0xf]
        %v557 = vld [vmem:[%s551 + $0x14] sm:$0xf]
        %v558 = vld [vmem:[%s551 + $0x18] sm:$0xf]
        %v559 = vld [vmem:[%s551 + $0x1c] sm:$0xf]
        %v568 = vunpack.c.l.b16 %v552
        %v569 = vunpack.c.l.b16 %v553
        %v570 = vunpack.c.l.b16 %v554
        %v571 = vunpack.c.l.b16 %v555
        %v572 = vunpack.c.l.b16 %v556
        %v573 = vunpack.c.l.b16 %v557
        %v574 = vunpack.c.l.b16 %v558
        %v575 = vunpack.c.l.b16 %v559
        %v576 = vpack.c.b16 %v569, %v568
        %v577 = vpack.c.b16 %v571, %v570
        %v578 = vpack.c.b16 %v573, %v572
        %v579 = vpack.c.b16 %v575, %v574
        %584 = vmatprep.subr.bf16.mxu0 0
        %585 = vmatpush1.bf16.msra.mxu0 %v576
        %586 = vmatprep.subr.bf16.mxu0 0
        %587 = vmatpush1.bf16.msra.mxu0 %v577
        %588 = vmatprep.subr.bf16.mxu0 0
        %589 = vmatpush1.bf16.msra.mxu0 %v578
        %590 = vmatprep.subr.bf16.mxu0 0
        %591 = vmatpush1.bf16.msra.mxu0 %v579
        %592 = vmatprep.subr.bf16.mxu0 0
        %593 = vmatpush1.bf16.msra.mxu0 0
        %594 = vmatprep.subr.bf16.mxu0 0
        %595 = vmatpush1.bf16.msra.mxu0 0
        %596 = vmatprep.subr.bf16.mxu0 0
        %597 = vmatpush1.bf16.msra.mxu0 0
        %598 = vmatprep.subr.bf16.mxu0 0
        %599 = vmatpush1.bf16.msra.mxu0 0
        %600 = vmatprep.subr.bf16.mxu0 0
        %601 = vmatpush1.bf16.msra.mxu0 0
        %602 = vmatprep.subr.bf16.mxu0 0
        %603 = vmatpush1.bf16.msra.mxu0 0
        %604 = vmatprep.subr.bf16.mxu0 0
        %605 = vmatpush1.bf16.msra.mxu0 0
        %606 = vmatprep.subr.bf16.mxu0 0
        %607 = vmatpush1.bf16.msra.mxu0 0
        %608 = vmatprep.subr.bf16.mxu0 0
        %609 = vmatpush1.bf16.msra.mxu0 0
        %610 = vmatprep.subr.bf16.mxu0 0
        %611 = vmatpush1.bf16.msra.mxu0 0
        %612 = vmatprep.subr.bf16.mxu0 0
        %613 = vmatpush1.bf16.msra.mxu0 0
        %614 = vmatprep.subr.bf16.mxu0 0
        %615 = vmatpush1.bf16.msra.mxu0 0
        %616 = vmatprep.mubr.bf16.mxu0 0
        %617 = vmatmul.mubr.bf16.gmra.mrb[0].mxu0 %v487
        %v618 = vpop.f32.mrb[0].mxu0
        %v619 = vadd.f32 0.0, %v618
        %v620 = vpop.f32.mrb[0].mxu0
        %v621 = vpop.f32.mrb[0].mxu0
        %v622 = vadd.f32 0.0, %v621
        %v623 = vpop.f32.mrb[0].mxu0
        %624 = vmatprep.mubr.bf16.mxu0 0
        %625 = vmatmul.mubr.bf16.gmra.mrb[0].mxu0 %v490
        %v626 = vpop.f32.mrb[0].mxu0
        %v627 = vadd.f32 0.0, %v626
        %v628 = vpop.f32.mrb[0].mxu0
        %v629 = vpop.f32.mrb[0].mxu0
        %v630 = vadd.f32 0.0, %v629
        %v631 = vpop.f32.mrb[0].mxu0
        %632 = vdwg.mxu0
        %s633 = scalar_lea.vmem %s2, 32
        %v634 = vld [vmem:[%s633] sm:$0xf]
        %v635 = vld [vmem:[%s633 + $0x4] sm:$0xf]
        %v636 = vld [vmem:[%s633 + $0x8] sm:$0xf]
        %v637 = vld [vmem:[%s633 + $0xc] sm:$0xf]
        %v638 = vld [vmem:[%s633 + $0x10] sm:$0xf]
        %v639 = vld [vmem:[%s633 + $0x14] sm:$0xf]
        %v640 = vld [vmem:[%s633 + $0x18] sm:$0xf]
        %v641 = vld [vmem:[%s633 + $0x1c] sm:$0xf]
        %v642 = vpack.c.bf16 %v622, %v619
        %v643 = vpack.c.bf16 %v630, %v627
        %v652 = vunpack.c.l.b16 %v634
        %v653 = vunpack.c.l.b16 %v635
        %v654 = vunpack.c.l.b16 %v636
        %v655 = vunpack.c.l.b16 %v637
        %v656 = vunpack.c.l.b16 %v638
        %v657 = vunpack.c.l.b16 %v639
        %v658 = vunpack.c.l.b16 %v640
        %v659 = vunpack.c.l.b16 %v641
        %v660 = vpack.c.b16 %v653, %v652
        %v661 = vpack.c.b16 %v655, %v654
        %v662 = vpack.c.b16 %v657, %v656
        %v663 = vpack.c.b16 %v659, %v658
        %vm664 = vcmask 261120
        %v666 = vsel %vm664, %v660, 0
        %v669 = vsel %vm664, %v661, 0
        %v672 = vsel %vm664, %v662, 0
        %v675 = vsel %vm664, %v663, 0
        %677 = vmatprep.subr.bf16.mxu0 0
        %678 = vmatpush1.bf16.msra.mxu0 %v642
        %679 = vmatprep.subr.bf16.mxu0 0
        %680 = vmatpush1.bf16.msra.mxu0 %v643
        %681 = vmatprep.subr.bf16.mxu0 0
        %682 = vmatpush1.bf16.msra.mxu0 0
        %683 = vmatprep.subr.bf16.mxu0 0
        %684 = vmatpush1.bf16.msra.mxu0 0
        %685 = vmatprep.subr.bf16.mxu0 0
        %686 = vmatpush1.bf16.msra.mxu0 0
        %687 = vmatprep.subr.bf16.mxu0 0
        %688 = vmatpush1.bf16.msra.mxu0 0
        %689 = vmatprep.subr.bf16.mxu0 0
        %690 = vmatpush1.bf16.msra.mxu0 0
        %691 = vmatprep.subr.bf16.mxu0 0
        %692 = vmatpush1.bf16.msra.mxu0 0
        %693 = vmatprep.subr.bf16.mxu0 0
        %694 = vmatpush1.bf16.msra.mxu0 0
        %695 = vmatprep.subr.bf16.mxu0 0
        %696 = vmatpush1.bf16.msra.mxu0 0
        %697 = vmatprep.subr.bf16.mxu0 0
        %698 = vmatpush1.bf16.msra.mxu0 0
        %699 = vmatprep.subr.bf16.mxu0 0
        %700 = vmatpush1.bf16.msra.mxu0 0
        %701 = vmatprep.subr.bf16.mxu0 0
        %702 = vmatpush1.bf16.msra.mxu0 0
        %703 = vmatprep.subr.bf16.mxu0 0
        %704 = vmatpush1.bf16.msra.mxu0 0
        %705 = vmatprep.subr.bf16.mxu0 0
        %706 = vmatpush1.bf16.msra.mxu0 0
        %707 = vmatprep.subr.bf16.mxu0 0
        %708 = vmatpush1.bf16.msra.mxu0 0
        %709 = vmatprep.mubr.bf16.mxu0 0
        %710 = vmatmul.mubr.bf16.gmra.mrb[0].mxu0 %v666
        %v711 = vpop.f32.mrb[0].mxu0
        %v712 = vadd.f32 0.0, %v711
        %v713 = vpop.f32.mrb[0].mxu0
        %v714 = vpop.f32.mrb[0].mxu0
        %v715 = vadd.f32 0.0, %v714
        %v716 = vpop.f32.mrb[0].mxu0
        %717 = vmatprep.mubr.bf16.mxu0 0
        %718 = vmatmul.mubr.bf16.gmra.mrb[0].mxu0 %v669
        %v719 = vpop.f32.mrb[0].mxu0
        %v720 = vadd.f32 0.0, %v719
        %v721 = vpop.f32.mrb[0].mxu0
        %v722 = vpop.f32.mrb[0].mxu0
        %v723 = vadd.f32 0.0, %v722
        %v724 = vpop.f32.mrb[0].mxu0
        %725 = vmatprep.mubr.bf16.mxu0 0
        %726 = vmatmul.mubr.bf16.gmra.mrb[0].mxu0 %v672
        %v727 = vpop.f32.mrb[0].mxu0
        %v728 = vadd.f32 0.0, %v727
        %v729 = vpop.f32.mrb[0].mxu0
        %v730 = vpop.f32.mrb[0].mxu0
        %v731 = vadd.f32 0.0, %v730
        %v732 = vpop.f32.mrb[0].mxu0
        %733 = vmatprep.mubr.bf16.mxu0 0
        %734 = vmatmul.mubr.bf16.gmra.mrb[0].mxu0 %v675
        %v735 = vpop.f32.mrb[0].mxu0
        %v736 = vadd.f32 0.0, %v735
        %v737 = vpop.f32.mrb[0].mxu0
        %v738 = vpop.f32.mrb[0].mxu0
        %v739 = vadd.f32 0.0, %v738
        %v740 = vpop.f32.mrb[0].mxu0
        %741 = vdwg.mxu0
        %v750 = vunpack.c.l.b16 %v541
        %v751 = vunpack.c.l.b16 %v542
        %v752 = vunpack.c.l.b16 %v543
        %v753 = vunpack.c.l.b16 %v544
        %v754 = vunpack.c.l.b16 %v545
        %v755 = vunpack.c.l.b16 %v546
        %v756 = vunpack.c.l.b16 %v547
        %v757 = vunpack.c.l.b16 %v548
        %v758 = vpack.c.b16 %v751, %v750
        %v759 = vpack.c.b16 %v753, %v752
        %v760 = vpack.c.b16 %v755, %v754
        %v761 = vpack.c.b16 %v757, %v756
        %v763 = vsel %vm664, %v758, 0
        %v766 = vsel %vm664, %v759, 0
        %v769 = vsel %vm664, %v760, 0
        %v772 = vsel %vm664, %v761, 0
        %774 = vmatprep.subr.bf16.mxu0 0
        %775 = vmatpush1.bf16.msra.mxu0 %v549
        %776 = vmatprep.subr.bf16.mxu0 0
        %777 = vmatpush1.bf16.msra.mxu0 %v550
        %778 = vmatprep.subr.bf16.mxu0 0
        %779 = vmatpush1.bf16.msra.mxu0 0
        %780 = vmatprep.subr.bf16.mxu0 0
        %781 = vmatpush1.bf16.msra.mxu0 0
        %782 = vmatprep.subr.bf16.mxu0 0
        %783 = vmatpush1.bf16.msra.mxu0 0
        %784 = vmatprep.subr.bf16.mxu0 0
        %785 = vmatpush1.bf16.msra.mxu0 0
        %786 = vmatprep.subr.bf16.mxu0 0
        %787 = vmatpush1.bf16.msra.mxu0 0
        %788 = vmatprep.subr.bf16.mxu0 0
        %789 = vmatpush1.bf16.msra.mxu0 0
        %790 = vmatprep.subr.bf16.mxu0 0
        %791 = vmatpush1.bf16.msra.mxu0 0
        %792 = vmatprep.subr.bf16.mxu0 0
        %793 = vmatpush1.bf16.msra.mxu0 0
        %794 = vmatprep.subr.bf16.mxu0 0
        %795 = vmatpush1.bf16.msra.mxu0 0
        %796 = vmatprep.subr.bf16.mxu0 0
        %797 = vmatpush1.bf16.msra.mxu0 0
        %798 = vmatprep.subr.bf16.mxu0 0
        %799 = vmatpush1.bf16.msra.mxu0 0
        %800 = vmatprep.subr.bf16.mxu0 0
        %801 = vmatpush1.bf16.msra.mxu0 0
        %802 = vmatprep.subr.bf16.mxu0 0
        %803 = vmatpush1.bf16.msra.mxu0 0
        %804 = vmatprep.subr.bf16.mxu0 0
        %805 = vmatpush1.bf16.msra.mxu0 0
        %806 = vmatprep.mubr.bf16.mxu0 0
        %807 = vmatmul.mubr.bf16.gmra.mrb[0].mxu0 %v763
        %v808 = vpop.f32.mrb[0].mxu0
        %v809 = vadd.f32 %v712, %v808
        %v810 = vpop.f32.mrb[0].mxu0
        %v811 = vpop.f32.mrb[0].mxu0
        %v812 = vadd.f32 %v715, %v811
        %v813 = vpop.f32.mrb[0].mxu0
        %814 = vmatprep.mubr.bf16.mxu0 0
        %815 = vmatmul.mubr.bf16.gmra.mrb[0].mxu0 %v766
        %v816 = vpop.f32.mrb[0].mxu0
        %v817 = vadd.f32 %v720, %v816
        %v818 = vpop.f32.mrb[0].mxu0
        %v819 = vpop.f32.mrb[0].mxu0
        %v820 = vadd.f32 %v723, %v819
        %v821 = vpop.f32.mrb[0].mxu0
        %822 = vmatprep.mubr.bf16.mxu0 0
        %823 = vmatmul.mubr.bf16.gmra.mrb[0].mxu0 %v769
        %v824 = vpop.f32.mrb[0].mxu0
        %v825 = vadd.f32 %v728, %v824
        %v826 = vpop.f32.mrb[0].mxu0
        %v827 = vpop.f32.mrb[0].mxu0
        %v828 = vadd.f32 %v731, %v827
        %v829 = vpop.f32.mrb[0].mxu0
        %830 = vmatprep.mubr.bf16.mxu0 0
        %831 = vmatmul.mubr.bf16.gmra.mrb[0].mxu0 %v772
        %v832 = vpop.f32.mrb[0].mxu0
        %v833 = vadd.f32 %v736, %v832
        %v834 = vpop.f32.mrb[0].mxu0
        %v835 = vpop.f32.mrb[0].mxu0
        %v836 = vadd.f32 %v739, %v835
        %v837 = vpop.f32.mrb[0].mxu0
        %838 = vdwg.mxu0
        %s839 = scalar_lea.vmem %s397, 64 [#allocation2]
        %v840 = vld [vmem:[%s839] sm:$0xf]
        %v841 = vld [vmem:[%s839 + $0x4] sm:$0xf]
        %v842 = vld [vmem:[%s839 + $0x8] sm:$0xf]
        %v843 = vld [vmem:[%s839 + $0xc] sm:$0xf]
        %v844 = vld [vmem:[%s839 + $0x10] sm:$0xf]
        %v845 = vld [vmem:[%s839 + $0x14] sm:$0xf]
        %v846 = vld [vmem:[%s839 + $0x18] sm:$0xf]
        %v847 = vld [vmem:[%s839 + $0x1c] sm:$0xf]
        %v856 = vunpack.c.l.b16 %v840
        %v857 = vunpack.c.l.b16 %v841
        %v858 = vunpack.c.l.b16 %v842
        %v859 = vunpack.c.l.b16 %v843
        %v860 = vunpack.c.l.b16 %v844
        %v861 = vunpack.c.l.b16 %v845
        %v862 = vunpack.c.l.b16 %v846
        %v863 = vunpack.c.l.b16 %v847
        %v864 = vpack.c.b16 %v857, %v856
        %v865 = vpack.c.b16 %v859, %v858
        %v866 = vpack.c.b16 %v861, %v860
        %v867 = vpack.c.b16 %v863, %v862
        %872 = vmatprep.subr.bf16.mxu0 0
        %873 = vmatpush1.bf16.msra.mxu0 %v864
        %874 = vmatprep.subr.bf16.mxu0 0
        %875 = vmatpush1.bf16.msra.mxu0 %v865
        %876 = vmatprep.subr.bf16.mxu0 0
        %877 = vmatpush1.bf16.msra.mxu0 %v866
        %878 = vmatprep.subr.bf16.mxu0 0
        %879 = vmatpush1.bf16.msra.mxu0 %v867
        %880 = vmatprep.subr.bf16.mxu0 0
        %881 = vmatpush1.bf16.msra.mxu0 0
        %882 = vmatprep.subr.bf16.mxu0 0
        %883 = vmatpush1.bf16.msra.mxu0 0
        %884 = vmatprep.subr.bf16.mxu0 0
        %885 = vmatpush1.bf16.msra.mxu0 0
        %886 = vmatprep.subr.bf16.mxu0 0
        %887 = vmatpush1.bf16.msra.mxu0 0
        %888 = vmatprep.subr.bf16.mxu0 0
        %889 = vmatpush1.bf16.msra.mxu0 0
        %890 = vmatprep.subr.bf16.mxu0 0
        %891 = vmatpush1.bf16.msra.mxu0 0
        %892 = vmatprep.subr.bf16.mxu0 0
        %893 = vmatpush1.bf16.msra.mxu0 0
        %894 = vmatprep.subr.bf16.mxu0 0
        %895 = vmatpush1.bf16.msra.mxu0 0
        %896 = vmatprep.subr.bf16.mxu0 0
        %897 = vmatpush1.bf16.msra.mxu0 0
        %898 = vmatprep.subr.bf16.mxu0 0
        %899 = vmatpush1.bf16.msra.mxu0 0
        %900 = vmatprep.subr.bf16.mxu0 0
        %901 = vmatpush1.bf16.msra.mxu0 0
        %902 = vmatprep.subr.bf16.mxu0 0
        %903 = vmatpush1.bf16.msra.mxu0 0
        %904 = vmatprep.mubr.bf16.mxu0 0
        %905 = vmatmul.mubr.bf16.gmra.mrb[0].mxu0 %v487
        %v906 = vpop.f32.mrb[0].mxu0
        %v907 = vadd.f32 0.0, %v906
        %v908 = vpop.f32.mrb[0].mxu0
        %v909 = vpop.f32.mrb[0].mxu0
        %v910 = vadd.f32 0.0, %v909
        %v911 = vpop.f32.mrb[0].mxu0
        %912 = vmatprep.mubr.bf16.mxu0 0
        %913 = vmatmul.mubr.bf16.gmra.mrb[0].mxu0 %v490
        %v914 = vpop.f32.mrb[0].mxu0
        %v915 = vadd.f32 0.0, %v914
        %v916 = vpop.f32.mrb[0].mxu0
        %v917 = vpop.f32.mrb[0].mxu0
        %v918 = vadd.f32 0.0, %v917
        %v919 = vpop.f32.mrb[0].mxu0
        %920 = vdwg.mxu0
        %s921 = scalar_lea.vmem %s2, 64
        %v922 = vld [vmem:[%s921] sm:$0xf]
        %v923 = vld [vmem:[%s921 + $0x4] sm:$0xf]
        %v924 = vld [vmem:[%s921 + $0x8] sm:$0xf]
        %v925 = vld [vmem:[%s921 + $0xc] sm:$0xf]
        %v926 = vld [vmem:[%s921 + $0x10] sm:$0xf]
        %v927 = vld [vmem:[%s921 + $0x14] sm:$0xf]
        %v928 = vld [vmem:[%s921 + $0x18] sm:$0xf]
        %v929 = vld [vmem:[%s921 + $0x1c] sm:$0xf]
        %v930 = vpack.c.bf16 %v910, %v907
        %v931 = vpack.c.bf16 %v918, %v915
        %v940 = vunpack.c.l.b16 %v922
        %v941 = vunpack.c.l.b16 %v923
        %v942 = vunpack.c.l.b16 %v924
        %v943 = vunpack.c.l.b16 %v925
        %v944 = vunpack.c.l.b16 %v926
        %v945 = vunpack.c.l.b16 %v927
        %v946 = vunpack.c.l.b16 %v928
        %v947 = vunpack.c.l.b16 %v929
        %v948 = vpack.c.b16 %v941, %v940
        %v949 = vpack.c.b16 %v943, %v942
        %v950 = vpack.c.b16 %v945, %v944
        %v951 = vpack.c.b16 %v947, %v946
        %v953 = vsel %vm664, %v948, 0
        %v956 = vsel %vm664, %v949, 0
        %v959 = vsel %vm664, %v950, 0
        %v962 = vsel %vm664, %v951, 0
        %964 = vmatprep.subr.bf16.mxu0 0
        %965 = vmatpush1.bf16.msra.mxu0 %v930
        %966 = vmatprep.subr.bf16.mxu0 0
        %967 = vmatpush1.bf16.msra.mxu0 %v931
        %968 = vmatprep.subr.bf16.mxu0 0
        %969 = vmatpush1.bf16.msra.mxu0 0
        %970 = vmatprep.subr.bf16.mxu0 0
        %971 = vmatpush1.bf16.msra.mxu0 0
        %972 = vmatprep.subr.bf16.mxu0 0
        %973 = vmatpush1.bf16.msra.mxu0 0
        %974 = vmatprep.subr.bf16.mxu0 0
        %975 = vmatpush1.bf16.msra.mxu0 0
        %976 = vmatprep.subr.bf16.mxu0 0
        %977 = vmatpush1.bf16.msra.mxu0 0
        %978 = vmatprep.subr.bf16.mxu0 0
        %979 = vmatpush1.bf16.msra.mxu0 0
        %980 = vmatprep.subr.bf16.mxu0 0
        %981 = vmatpush1.bf16.msra.mxu0 0
        %982 = vmatprep.subr.bf16.mxu0 0
        %983 = vmatpush1.bf16.msra.mxu0 0
        %984 = vmatprep.subr.bf16.mxu0 0
        %985 = vmatpush1.bf16.msra.mxu0 0
        %986 = vmatprep.subr.bf16.mxu0 0
        %987 = vmatpush1.bf16.msra.mxu0 0
        %988 = vmatprep.subr.bf16.mxu0 0
        %989 = vmatpush1.bf16.msra.mxu0 0
        %990 = vmatprep.subr.bf16.mxu0 0
        %991 = vmatpush1.bf16.msra.mxu0 0
        %992 = vmatprep.subr.bf16.mxu0 0
        %993 = vmatpush1.bf16.msra.mxu0 0
        %994 = vmatprep.subr.bf16.mxu0 0
        %995 = vmatpush1.bf16.msra.mxu0 0
        %996 = vmatprep.mubr.bf16.mxu0 0
        %997 = vmatmul.mubr.bf16.gmra.mrb[0].mxu0 %v953
        %v998 = vpop.f32.mrb[0].mxu0
        %v999 = vadd.f32 0.0, %v998
        %v1000 = vpop.f32.mrb[0].mxu0
        %v1001 = vpop.f32.mrb[0].mxu0
        %v1002 = vadd.f32 0.0, %v1001
        %v1003 = vpop.f32.mrb[0].mxu0
        %1004 = vmatprep.mubr.bf16.mxu0 0
        %1005 = vmatmul.mubr.bf16.gmra.mrb[0].mxu0 %v956
        %v1006 = vpop.f32.mrb[0].mxu0
        %v1007 = vadd.f32 0.0, %v1006
        %v1008 = vpop.f32.mrb[0].mxu0
        %v1009 = vpop.f32.mrb[0].mxu0
        %v1010 = vadd.f32 0.0, %v1009
        %v1011 = vpop.f32.mrb[0].mxu0
        %1012 = vmatprep.mubr.bf16.mxu0 0
        %1013 = vmatmul.mubr.bf16.gmra.mrb[0].mxu0 %v959
        %v1014 = vpop.f32.mrb[0].mxu0
        %v1015 = vadd.f32 0.0, %v1014
        %v1016 = vpop.f32.mrb[0].mxu0
        %v1017 = vpop.f32.mrb[0].mxu0
        %v1018 = vadd.f32 0.0, %v1017
        %v1019 = vpop.f32.mrb[0].mxu0
        %1020 = vmatprep.mubr.bf16.mxu0 0
        %1021 = vmatmul.mubr.bf16.gmra.mrb[0].mxu0 %v962
        %v1022 = vpop.f32.mrb[0].mxu0
        %v1023 = vadd.f32 0.0, %v1022
        %v1024 = vpop.f32.mrb[0].mxu0
        %v1025 = vpop.f32.mrb[0].mxu0
        %v1026 = vadd.f32 0.0, %v1025
        %v1027 = vpop.f32.mrb[0].mxu0
        %1028 = vdwg.mxu0
        %v1029 = vadd.f32 %v809, %v999
        %v1030 = vadd.f32 %v812, %v1002
        %v1031 = vadd.f32 %v817, %v1007
        %v1032 = vadd.f32 %v820, %v1010
        %v1033 = vadd.f32 %v825, %v1015
        %v1034 = vadd.f32 %v828, %v1018
        %v1035 = vadd.f32 %v833, %v1023
        %v1036 = vadd.f32 %v836, %v1026
        %v1037 = vadd.f32 %v1029, %v1030
        %v1038 = vadd.f32 %v1037, %v1031
        %v1039 = vadd.f32 %v1038, %v1032
        %v1040 = vadd.f32 %v1039, %v1033
        %v1041 = vadd.f32 %v1040, %v1034
        %v1042 = vadd.f32 %v1041, %v1035
        %v1043 = vadd.f32 %v1042, %v1036
        %v1044 = vrot.slane %v1043, 4
        %v1045 = vadd.f32 %v1043, %v1044
        %v1046 = vrot.slane %v1045, 2
        %v1047 = vadd.f32 %v1045, %v1046
        %v1048 = vrot.slane %v1047, 1
        %v1049 = vadd.f32 %v1047, %v1048
        %v1050 = vmul.f32 %v1029, %v1029
        %v1051 = vmul.f32 %v1030, %v1030
        %v1052 = vmul.f32 %v1031, %v1031
        %v1053 = vmul.f32 %v1032, %v1032
        %v1054 = vmul.f32 %v1033, %v1033
        %v1055 = vmul.f32 %v1034, %v1034
        %v1056 = vmul.f32 %v1035, %v1035
        %v1057 = vmul.f32 %v1036, %v1036
        %v1058 = vadd.f32 %v1050, %v1051
        %v1059 = vadd.f32 %v1058, %v1052
        %v1060 = vadd.f32 %v1059, %v1053
        %v1061 = vadd.f32 %v1060, %v1054
        %v1062 = vadd.f32 %v1061, %v1055
        %v1063 = vadd.f32 %v1062, %v1056
        %v1064 = vadd.f32 %v1063, %v1057
        %v1065 = vrot.slane %v1064, 4
        %v1066 = vadd.f32 %v1064, %v1065
        %v1067 = vrot.slane %v1066, 2
        %v1068 = vadd.f32 %v1066, %v1067
        %v1069 = vrot.slane %v1068, 1
        %v1070 = vadd.f32 %v1068, %v1069
        %v1071 = vld [vmem:[%s3] sm:$0xff]
        %v1072 = vld [vmem:[%s3 + $0x8] sm:$0xff]
        %v1073 = vld [vmem:[%s3 + $0x10] sm:$0xff]
        %v1074 = vld [vmem:[%s3 + $0x18] sm:$0xff]
        %v1075 = vld [vmem:[%s3 + $0x20] sm:$0xff]
        %v1076 = vld [vmem:[%s3 + $0x28] sm:$0xff]
        %v1077 = vld [vmem:[%s3 + $0x30] sm:$0xff]
        %v1078 = vld [vmem:[%s3 + $0x38] sm:$0xff]
        %v1079 = vld [vmem:[%s3 + $0x40] sm:$0xff]
        %v1080 = vld [vmem:[%s3 + $0x48] sm:$0xff]
        %v1081 = vld [vmem:[%s3 + $0x50] sm:$0xff]
        %v1082 = vld [vmem:[%s3 + $0x58] sm:$0xff]
        %v1083 = vld [vmem:[%s3 + $0x60] sm:$0xff]
        %v1084 = vld [vmem:[%s3 + $0x68] sm:$0xff]
        %v1085 = vld [vmem:[%s3 + $0x70] sm:$0xff]
        %v1086 = vld [vmem:[%s3 + $0x78] sm:$0xff]
        %1087 = vmatprep.subr.mxu0 0.0
        %1088 = vmatpush1.msra.mxu0 %v1071
        %1089 = vmatprep.subr.mxu0 0.0
        %1090 = vmatpush1.msra.mxu0 %v1072
        %1091 = vmatprep.subr.mxu0 0.0
        %1092 = vmatpush1.msra.mxu0 %v1073
        %1093 = vmatprep.subr.mxu0 0.0
        %1094 = vmatpush1.msra.mxu0 %v1074
        %1095 = vmatprep.subr.mxu0 0.0
        %1096 = vmatpush1.msra.mxu0 %v1075
        %1097 = vmatprep.subr.mxu0 0.0
        %1098 = vmatpush1.msra.mxu0 %v1076
        %1099 = vmatprep.subr.mxu0 0.0
        %1100 = vmatpush1.msra.mxu0 %v1077
        %1101 = vmatprep.subr.mxu0 0.0
        %1102 = vmatpush1.msra.mxu0 %v1078
        %1103 = vmatprep.subr.mxu0 0.0
        %1104 = vmatpush1.msra.mxu0 %v1079
        %1105 = vmatprep.subr.mxu0 0.0
        %1106 = vmatpush1.msra.mxu0 %v1080
        %1107 = vmatprep.subr.mxu0 0.0
        %1108 = vmatpush1.msra.mxu0 %v1081
        %1109 = vmatprep.subr.mxu0 0.0
        %1110 = vmatpush1.msra.mxu0 %v1082
        %1111 = vmatprep.subr.mxu0 0.0
        %1112 = vmatpush1.msra.mxu0 %v1083
        %1113 = vmatprep.subr.mxu0 0.0
        %1114 = vmatpush1.msra.mxu0 %v1084
        %1115 = vmatprep.subr.mxu0 0.0
        %1116 = vmatpush1.msra.mxu0 %v1085
        %1117 = vmatprep.subr.mxu0 0.0
        %1118 = vmatpush1.msra.mxu0 %v1086
        %1119 = vmatprep.subr.mxu0 0.0
        %1120 = vmatpush1.msra.mxu0 0.0
        %1121 = vmatprep.subr.mxu0 0.0
        %1122 = vmatpush1.msra.mxu0 0.0
        %1123 = vmatprep.subr.mxu0 0.0
        %1124 = vmatpush1.msra.mxu0 0.0
        %1125 = vmatprep.subr.mxu0 0.0
        %1126 = vmatpush1.msra.mxu0 0.0
        %1127 = vmatprep.subr.mxu0 0.0
        %1128 = vmatpush1.msra.mxu0 0.0
        %1129 = vmatprep.subr.mxu0 0.0
        %1130 = vmatpush1.msra.mxu0 0.0
        %1131 = vmatprep.subr.mxu0 0.0
        %1132 = vmatpush1.msra.mxu0 0.0
        %1133 = vmatprep.subr.mxu0 0.0
        %1134 = vmatpush1.msra.mxu0 0.0
        %1135 = vmatprep.subr.mxu0 0.0
        %1136 = vmatpush1.msra.mxu0 0.0
        %1137 = vmatprep.subr.mxu0 0.0
        %1138 = vmatpush1.msra.mxu0 0.0
        %1139 = vmatprep.subr.mxu0 0.0
        %1140 = vmatpush1.msra.mxu0 0.0
        %1141 = vmatprep.subr.mxu0 0.0
        %1142 = vmatpush1.msra.mxu0 0.0
        %1143 = vmatprep.subr.mxu0 0.0
        %1144 = vmatpush1.msra.mxu0 0.0
        %1145 = vmatprep.subr.mxu0 0.0
        %1146 = vmatpush1.msra.mxu0 0.0
        %1147 = vmatprep.subr.mxu0 0.0
        %1148 = vmatpush1.msra.mxu0 0.0
        %1149 = vmatprep.subr.mxu0 0.0
        %1150 = vmatpush1.msra.mxu0 0.0
        %1151 = vmatprep.mubr.f32.mxu0 0.0
        %1152 = vmatmul.mubr.f32.gmra.mrb[0].mxu0 %v1049
        %v1153 = vpop.f32.mrb[0].mxu0
        %v1154 = vadd.f32 0.0, %v1153
        %v1155 = vpop.f32.mrb[0].mxu0
        %1156 = vdwg.mxu0
        %1157 = vmatprep.subr.mxu0 0.0
        %1158 = vmatpush1.msra.mxu0 %v1071
        %1159 = vmatprep.subr.mxu0 0.0
        %1160 = vmatpush1.msra.mxu0 %v1072
        %1161 = vmatprep.subr.mxu0 0.0
        %1162 = vmatpush1.msra.mxu0 %v1073
        %1163 = vmatprep.subr.mxu0 0.0
        %1164 = vmatpush1.msra.mxu0 %v1074
        %1165 = vmatprep.subr.mxu0 0.0
        %1166 = vmatpush1.msra.mxu0 %v1075
        %1167 = vmatprep.subr.mxu0 0.0
        %1168 = vmatpush1.msra.mxu0 %v1076
        %1169 = vmatprep.subr.mxu0 0.0
        %1170 = vmatpush1.msra.mxu0 %v1077
        %1171 = vmatprep.subr.mxu0 0.0
        %1172 = vmatpush1.msra.mxu0 %v1078
        %1173 = vmatprep.subr.mxu0 0.0
        %1174 = vmatpush1.msra.mxu0 %v1079
        %1175 = vmatprep.subr.mxu0 0.0
        %1176 = vmatpush1.msra.mxu0 %v1080
        %1177 = vmatprep.subr.mxu0 0.0
        %1178 = vmatpush1.msra.mxu0 %v1081
        %1179 = vmatprep.subr.mxu0 0.0
        %1180 = vmatpush1.msra.mxu0 %v1082
        %1181 = vmatprep.subr.mxu0 0.0
        %1182 = vmatpush1.msra.mxu0 %v1083
        %1183 = vmatprep.subr.mxu0 0.0
        %1184 = vmatpush1.msra.mxu0 %v1084
        %1185 = vmatprep.subr.mxu0 0.0
        %1186 = vmatpush1.msra.mxu0 %v1085
        %1187 = vmatprep.subr.mxu0 0.0
        %1188 = vmatpush1.msra.mxu0 %v1086
        %1189 = vmatprep.subr.mxu0 0.0
        %1190 = vmatpush1.msra.mxu0 0.0
        %1191 = vmatprep.subr.mxu0 0.0
        %1192 = vmatpush1.msra.mxu0 0.0
        %1193 = vmatprep.subr.mxu0 0.0
        %1194 = vmatpush1.msra.mxu0 0.0
        %1195 = vmatprep.subr.mxu0 0.0
        %1196 = vmatpush1.msra.mxu0 0.0
        %1197 = vmatprep.subr.mxu0 0.0
        %1198 = vmatpush1.msra.mxu0 0.0
        %1199 = vmatprep.subr.mxu0 0.0
        %1200 = vmatpush1.msra.mxu0 0.0
        %1201 = vmatprep.subr.mxu0 0.0
        %1202 = vmatpush1.msra.mxu0 0.0
        %1203 = vmatprep.subr.mxu0 0.0
        %1204 = vmatpush1.msra.mxu0 0.0
        %1205 = vmatprep.subr.mxu0 0.0
        %1206 = vmatpush1.msra.mxu0 0.0
        %1207 = vmatprep.subr.mxu0 0.0
        %1208 = vmatpush1.msra.mxu0 0.0
        %1209 = vmatprep.subr.mxu0 0.0
        %1210 = vmatpush1.msra.mxu0 0.0
        %1211 = vmatprep.subr.mxu0 0.0
        %1212 = vmatpush1.msra.mxu0 0.0
        %1213 = vmatprep.subr.mxu0 0.0
        %1214 = vmatpush1.msra.mxu0 0.0
        %1215 = vmatprep.subr.mxu0 0.0
        %1216 = vmatpush1.msra.mxu0 0.0
        %1217 = vmatprep.subr.mxu0 0.0
        %1218 = vmatpush1.msra.mxu0 0.0
        %1219 = vmatprep.subr.mxu0 0.0
        %1220 = vmatpush1.msra.mxu0 0.0
        %1221 = vmatprep.mubr.f32.mxu0 0.0
        %1222 = vmatmul.mubr.f32.gmra.mrb[0].mxu0 %v1070
        %v1223 = vpop.f32.mrb[0].mxu0
        %v1224 = vadd.f32 0.0, %v1223
        %v1225 = vpop.f32.mrb[0].mxu0
        %1226 = vdwg.mxu0
        %v1227 = vrcp.pop 2048.0
        %v1228 = vmul.f32 %v1154, %v1227
        %v1229 = vmul.f32 %v1224, %v1227
        %v1230 = vmul.f32 %v1228, %v1228
        %v1231 = vsub.f32 %v1229, %v1230
        %v1232 = vadd.f32 %v1231, 1e-05
        %v1233 = vrsqrt.pop %v1232
        %v1234 = vld [vmem:[%s4] sm:$0xf]
        %vm1235 = vcmask 31744
        %v1237 = vsel %vm1235, %v1228, 0
        %vm1239 = vcmask 1043456
        %v1241 = vsel %vm1239, %v1234, 0
        %1243 = vmatprep.subr.mxu0 0.0
        %1244 = vmatpush1.msra.mxu0 %v1241
        %1245 = vmatprep.subr.mxu0 0.0
        %1246 = vmatpush1.msra.mxu0 0.0
        %1247 = vmatprep.subr.mxu0 0.0
        %1248 = vmatpush1.msra.mxu0 0.0
        %1249 = vmatprep.subr.mxu0 0.0
        %1250 = vmatpush1.msra.mxu0 0.0
        %1251 = vmatprep.subr.mxu0 0.0
        %1252 = vmatpush1.msra.mxu0 0.0
        %1253 = vmatprep.subr.mxu0 0.0
        %1254 = vmatpush1.msra.mxu0 0.0
        %1255 = vmatprep.subr.mxu0 0.0
        %1256 = vmatpush1.msra.mxu0 0.0
        %1257 = vmatprep.subr.mxu0 0.0
        %1258 = vmatpush1.msra.mxu0 0.0
        %1259 = vmatprep.subr.mxu0 0.0
        %1260 = vmatpush1.msra.mxu0 0.0
        %1261 = vmatprep.subr.mxu0 0.0
        %1262 = vmatpush1.msra.mxu0 0.0
        %1263 = vmatprep.subr.mxu0 0.0
        %1264 = vmatpush1.msra.mxu0 0.0
        %1265 = vmatprep.subr.mxu0 0.0
        %1266 = vmatpush1.msra.mxu0 0.0
        %1267 = vmatprep.subr.mxu0 0.0
        %1268 = vmatpush1.msra.mxu0 0.0
        %1269 = vmatprep.subr.mxu0 0.0
        %1270 = vmatpush1.msra.mxu0 0.0
        %1271 = vmatprep.subr.mxu0 0.0
        %1272 = vmatpush1.msra.mxu0 0.0
        %1273 = vmatprep.subr.mxu0 0.0
        %1274 = vmatpush1.msra.mxu0 0.0
        %1275 = vmatprep.subr.mxu0 0.0
        %1276 = vmatpush1.msra.mxu0 0.0
        %1277 = vmatprep.subr.mxu0 0.0
        %1278 = vmatpush1.msra.mxu0 0.0
        %1279 = vmatprep.subr.mxu0 0.0
        %1280 = vmatpush1.msra.mxu0 0.0
        %1281 = vmatprep.subr.mxu0 0.0
        %1282 = vmatpush1.msra.mxu0 0.0
        %1283 = vmatprep.subr.mxu0 0.0
        %1284 = vmatpush1.msra.mxu0 0.0
        %1285 = vmatprep.subr.mxu0 0.0
        %1286 = vmatpush1.msra.mxu0 0.0
        %1287 = vmatprep.subr.mxu0 0.0
        %1288 = vmatpush1.msra.mxu0 0.0
        %1289 = vmatprep.subr.mxu0 0.0
        %1290 = vmatpush1.msra.mxu0 0.0
        %1291 = vmatprep.subr.mxu0 0.0
        %1292 = vmatpush1.msra.mxu0 0.0
        %1293 = vmatprep.subr.mxu0 0.0
        %1294 = vmatpush1.msra.mxu0 0.0
        %1295 = vmatprep.subr.mxu0 0.0
        %1296 = vmatpush1.msra.mxu0 0.0
        %1297 = vmatprep.subr.mxu0 0.0
        %1298 = vmatpush1.msra.mxu0 0.0
        %1299 = vmatprep.subr.mxu0 0.0
        %1300 = vmatpush1.msra.mxu0 0.0
        %1301 = vmatprep.subr.mxu0 0.0
        %1302 = vmatpush1.msra.mxu0 0.0
        %1303 = vmatprep.subr.mxu0 0.0
        %1304 = vmatpush1.msra.mxu0 0.0
        %1305 = vmatprep.subr.mxu0 0.0
        %1306 = vmatpush1.msra.mxu0 0.0
        %1307 = vmatprep.mubr.f32.mxu0 0.0
        %1308 = vmatmul.mubr.f32.gmra.mrb[0].mxu0 %v1237
        %v1309 = vpop.f32.mrb[0].mxu0
        %v1310 = vadd.f32 0.0, %v1309
        %v1311 = vpop.f32.mrb[0].mxu0
        %1312 = vdwg.mxu0
        %v1314 = vsel %vm1235, %v1233, 0
        %1316 = vmatprep.subr.mxu0 0.0
        %1317 = vmatpush1.msra.mxu0 %v1241
        %1318 = vmatprep.subr.mxu0 0.0
        %1319 = vmatpush1.msra.mxu0 0.0
        %1320 = vmatprep.subr.mxu0 0.0
        %1321 = vmatpush1.msra.mxu0 0.0
        %1322 = vmatprep.subr.mxu0 0.0
        %1323 = vmatpush1.msra.mxu0 0.0
        %1324 = vmatprep.subr.mxu0 0.0
        %1325 = vmatpush1.msra.mxu0 0.0
        %1326 = vmatprep.subr.mxu0 0.0
        %1327 = vmatpush1.msra.mxu0 0.0
        %1328 = vmatprep.subr.mxu0 0.0
        %1329 = vmatpush1.msra.mxu0 0.0
        %1330 = vmatprep.subr.mxu0 0.0
        %1331 = vmatpush1.msra.mxu0 0.0
        %1332 = vmatprep.subr.mxu0 0.0
        %1333 = vmatpush1.msra.mxu0 0.0
        %1334 = vmatprep.subr.mxu0 0.0
        %1335 = vmatpush1.msra.mxu0 0.0
        %1336 = vmatprep.subr.mxu0 0.0
        %1337 = vmatpush1.msra.mxu0 0.0
        %1338 = vmatprep.subr.mxu0 0.0
        %1339 = vmatpush1.msra.mxu0 0.0
        %1340 = vmatprep.subr.mxu0 0.0
        %1341 = vmatpush1.msra.mxu0 0.0
        %1342 = vmatprep.subr.mxu0 0.0
        %1343 = vmatpush1.msra.mxu0 0.0
        %1344 = vmatprep.subr.mxu0 0.0
        %1345 = vmatpush1.msra.mxu0 0.0
        %1346 = vmatprep.subr.mxu0 0.0
        %1347 = vmatpush1.msra.mxu0 0.0
        %1348 = vmatprep.subr.mxu0 0.0
        %1349 = vmatpush1.msra.mxu0 0.0
        %1350 = vmatprep.subr.mxu0 0.0
        %1351 = vmatpush1.msra.mxu0 0.0
        %1352 = vmatprep.subr.mxu0 0.0
        %1353 = vmatpush1.msra.mxu0 0.0
        %1354 = vmatprep.subr.mxu0 0.0
        %1355 = vmatpush1.msra.mxu0 0.0
        %1356 = vmatprep.subr.mxu0 0.0
        %1357 = vmatpush1.msra.mxu0 0.0
        %1358 = vmatprep.subr.mxu0 0.0
        %1359 = vmatpush1.msra.mxu0 0.0
        %1360 = vmatprep.subr.mxu0 0.0
        %1361 = vmatpush1.msra.mxu0 0.0
        %1362 = vmatprep.subr.mxu0 0.0
        %1363 = vmatpush1.msra.mxu0 0.0
        %1364 = vmatprep.subr.mxu0 0.0
        %1365 = vmatpush1.msra.mxu0 0.0
        %1366 = vmatprep.subr.mxu0 0.0
        %1367 = vmatpush1.msra.mxu0 0.0
        %1368 = vmatprep.subr.mxu0 0.0
        %1369 = vmatpush1.msra.mxu0 0.0
        %1370 = vmatprep.subr.mxu0 0.0
        %1371 = vmatpush1.msra.mxu0 0.0
        %1372 = vmatprep.subr.mxu0 0.0
        %1373 = vmatpush1.msra.mxu0 0.0
        %1374 = vmatprep.subr.mxu0 0.0
        %1375 = vmatpush1.msra.mxu0 0.0
        %1376 = vmatprep.subr.mxu0 0.0
        %1377 = vmatpush1.msra.mxu0 0.0
        %1378 = vmatprep.subr.mxu0 0.0
        %1379 = vmatpush1.msra.mxu0 0.0
        %1380 = vmatprep.mubr.f32.mxu0 0.0
        %1381 = vmatmul.mubr.f32.gmra.mrb[0].mxu0 %v1314
        %v1382 = vpop.f32.mrb[0].mxu0
        %v1383 = vadd.f32 0.0, %v1382
        %v1384 = vpop.f32.mrb[0].mxu0
        %1385 = vdwg.mxu0
        %v1386 = vld [vmem:[%s434] sm:$0x1]
        %v1387 = vmul.f32 %v1383, %v1386
        %v1388 = vlaneseq
        %v1389 = vshrl.u32 %v1388, 7
        %v1390 = vsub.s32 0, %v1389
        %v1391 = vrot.slane %v1310, %v1390
        %v1392 = vsub.f32 %v1029, %v1391
        %v1393 = vsub.f32 %v1030, %v1391
        %v1394 = vsub.f32 %v1031, %v1391
        %v1395 = vsub.f32 %v1032, %v1391
        %v1396 = vsub.f32 %v1033, %v1391
        %v1397 = vsub.f32 %v1034, %v1391
        %v1398 = vsub.f32 %v1035, %v1391
        %v1399 = vsub.f32 %v1036, %v1391
        %v1400 = vlaneseq
        %v1401 = vshrl.u32 %v1400, 7
        %v1402 = vsub.s32 0, %v1401
        %v1403 = vrot.slane %v1387, %v1402
        %v1404 = vmul.f32 %v1392, %v1403
        %v1405 = vmul.f32 %v1393, %v1403
        %v1406 = vmul.f32 %v1394, %v1403
        %v1407 = vmul.f32 %v1395, %v1403
        %v1408 = vmul.f32 %v1396, %v1403
        %v1409 = vmul.f32 %v1397, %v1403
        %v1410 = vmul.f32 %v1398, %v1403
        %v1411 = vmul.f32 %v1399, %v1403
        %v1412 = vld [vmem:[%s437] sm:$0x1]
        %v1414 = vlaneseq
        %v1415 = vshrl.u32 %v1414, 7
        %v1416 = vsub.s32 0, %v1415
        %v1417 = vrot.slane %v1412, %v1416
        %v1419 = vadd.f32 %v1404, %v1417
        %v1420 = vadd.f32 %v1405, %v1417
        %v1421 = vadd.f32 %v1406, %v1417
        %v1422 = vadd.f32 %v1407, %v1417
        %v1423 = vadd.f32 %v1408, %v1417
        %v1424 = vadd.f32 %v1409, %v1417
        %v1425 = vadd.f32 %v1410, %v1417
        %v1426 = vadd.f32 %v1411, %v1417
        %1427 = vst [vmem:[%s431] sm:$0xff] %v1419
        %1428 = vst [vmem:[%s431 + $0x8] sm:$0xff] %v1420
        %1429 = vst [vmem:[%s431 + $0x10] sm:$0xff] %v1421
        %1430 = vst [vmem:[%s431 + $0x18] sm:$0xff] %v1422
        %1431 = vst [vmem:[%s431 + $0x20] sm:$0xff] %v1423
        %1432 = vst [vmem:[%s431 + $0x28] sm:$0xff] %v1424
        %1433 = vst [vmem:[%s431 + $0x30] sm:$0xff] %v1425
        %1434 = vst [vmem:[%s431 + $0x38] sm:$0xff] %v1426
        %s1435 = sand.u32 %s191, 1
        %s1436 = scalar_lea.sflag [#allocation4], %s1435
        %s1437 = sand.u32 %s191, 1
        %s1438 = smul.addr %s1437, 64
        %s1439 = scalar_lea.vmem [#allocation3], %s1438
        // Predicated region
        $region90: #{tpu_custom_call.1} parent=84 // pred_check
          %p1440 = pneg %p201
        $region91: #{tpu_custom_call.1} parent=84 // pred_check_branch
          %1442 = sbr.rel (%p1440) target = $region93
        $region92: #{tpu_custom_call.1} parent=84 // pred_region
          %s1444 = ssub.s32 1024, 1024
          %1445 = vsyncadd %s1436, %s1444
          %s1446 = smul.addr %s21, 128
          %s1447 = scalar_lea.hbm %s7, %s1446
          %s1448 = sshll.u32 %s1439, 4
          %s1449 = int_to_ptr.vmem [resolvable:$true] %s1448
          %1454 = dma.vmem_to_hbm [thread:$0]  %s1449, 1024, %s1447, %s1436, 128, 256, 8
        $region93: #{tpu_custom_call.1} parent=84 // pred_fallthru
          _
      $region85: #{tpu_custom_call.1} parent=5 // pred_fallthru
        _
      %p1455 = scmp.le.s32.totalorder 2, %s16
      // Predicated region
      $region94: #{tpu_custom_call.1} parent=5 // pred_check
        %p1456 = pneg %p1455
      $region95: #{tpu_custom_call.1} parent=5 // pred_check_branch
        %1458 = sbr.rel (%p1456) target = $region97
      $region96: #{tpu_custom_call.1} parent=5 // pred_region
        %s1459 = ssub.s32 %s16, 2
        // Predicated region
        $region98: #{tpu_custom_call.1} parent=96 // pred_check
          %p1460 = pneg %p207
        $region99: #{tpu_custom_call.1} parent=96 // pred_check_branch
          %1462 = sbr.rel (%p1460) target = $region101
        $region100: #{tpu_custom_call.1} parent=96 // pred_region
          %s1463 = sand.u32 %s192, 1
          %s1464 = scalar_lea.sflag [#allocation4], %s1463
          %s1465 = sand.u32 %s192, 1
          %s1466 = smul.addr %s1465, 64
          %s1467 = scalar_lea.vmem [#allocation3], %s1466
          %1468 = dma.done %s1464, 1024
        $region101: #{tpu_custom_call.1} parent=96 // pred_fallthru
          _
      $region97: #{tpu_custom_call.1} parent=5 // pred_fallthru
        _
    $region6: #{tpu_custom_call.1} parent=1 // loop_footer
      %s20 = sadd.s32 1, %s16
    $region7: #{tpu_custom_call.1} parent=1 // loop_footer_branch
      %15 = sbr.rel target = $region3
    $region8: #{tpu_custom_call.1} parent=1 // loop_exit
      _
    %1469 = vsyncpa [#allocation4], 1
    %s1470 = scalar_lea.sflag [#allocation4], 1
    %1471 = vsyncpa %s1470, 1

</llo_original>
